<compile_context>
chip_gen: v7x
topology: tpu7x:2x2x1
jax: 0.10.0
libtpu: 0.0.40
codegen_flags: <defaults>
</compile_context>

<pallas_src>
import functools

import jax
import jax.numpy as jnp
from jax.experimental import pallas as pl
from jax.experimental.pallas import tpu as pltpu

FEATS = [86, 43, 21, 10, 20, 40, 80, 1317]
OUT_PAD = 1408                                   # 1317 -> 11 * 128 (lane-dense)
B_PAD = 8                                        # graph batch padded to 8 sublanes

# Packed-bias layout: each layer's bias starts at a 128-aligned lane offset.
BIAS_OFFS = [0, 128, 256, 384, 512, 640, 768]
BIAS_TOTAL = BIAS_OFFS[-1] + OUT_PAD             # 2176

# Packed-weight layout for layers 1..6: rows (fan-in) padded to multiples of 16
# (bf16 sublane tile) and stacked; all fan-outs fit in 128 lanes.
_FIN_PAD = [96, 48, 32, 16, 32, 48]              # 86,43,21,10,20,40 -> pad16
WROW = [0, 96, 144, 176, 192, 224]               # 16-aligned row offsets
WPACK_ROWS = 272


def mlp_kernel(xs_b_ref, xt_b_ref, x_s_ref, x_t_ref, wpack_ref, w7_ref,
               bias_ref, y_ref, sig_ref):
    # ---- global_mean_pool for both node sets, built and fused in-kernel ----
    def pool(b_ref, x_ref):
        bidx = b_ref[...]                                        # (1, N) int32
        n = bidx.shape[1]
        gid = jax.lax.broadcasted_iota(jnp.int32, (B_PAD, n), 0)  # graph ids
        onehot = (bidx == gid).astype(jnp.float32)               # (B_PAD, N)
        cnt = jnp.maximum(jnp.sum(onehot, axis=1, keepdims=True), 1.0)
        return jnp.dot(onehot / cnt, x_ref[...],
                       preferred_element_type=jnp.float32)       # (B_PAD, 86)

    h = pool(xs_b_ref, x_s_ref) + pool(xt_b_ref, x_t_ref)        # combo, f32

    # ---- 6 x (Linear + folded eval-BN -> ReLU); Dropout1d == identity ----
    for i in range(6):
        w = wpack_ref[pl.ds(WROW[i], FEATS[i]), pl.ds(0, FEATS[i + 1])]  # bf16
        b = bias_ref[:, pl.ds(BIAS_OFFS[i], FEATS[i + 1])]               # f32
        y = jnp.dot(h.astype(jnp.bfloat16), w,
                    preferred_element_type=jnp.float32) + b
        h = jnp.maximum(y, 0.0)

    # ---- final Linear (columns padded to 1408 with zeros host-side) ----
    b7 = bias_ref[:, pl.ds(BIAS_OFFS[6], OUT_PAD)]
    y = jnp.dot(h.astype(jnp.bfloat16), w7_ref[...],
                preferred_element_type=jnp.float32) + b7
    y_ref[...] = y
    # sigmoid = 1 / (1 + exp(-y)); exp + reciprocal both run on the EUP slot.
    sig_ref[...] = pl.reciprocal(1.0 + jnp.exp(-y), approx=True)


def prepare_params(params):
    """One-time host-side prep (outside the hot path): fold eval-mode BN into
    weights/bias, transpose to [fin, fout], pack W1..W6 into one bf16 buffer,
    zero-pad W7 columns to OUT_PAD, pack all biases into one f32 row."""
    wpack = jnp.zeros((WPACK_ROWS, 128), jnp.float32)
    bias_packed = jnp.zeros((1, BIAS_TOTAL), jnp.float32)
    for i in range(6):
        w, b, gamma, beta, rm, rv = params[i]
        scale = gamma / jnp.sqrt(rv + 1e-5)                 # eval-mode BN fold
        shift = beta - rm * scale
        w_eff = w.T * scale[None, :]                        # [fin, fout]
        b_eff = b * scale + shift
        wpack = wpack.at[WROW[i]:WROW[i] + FEATS[i], :FEATS[i + 1]].set(w_eff)
        bias_packed = bias_packed.at[
            0, BIAS_OFFS[i]:BIAS_OFFS[i] + FEATS[i + 1]].set(b_eff)
    w7, b7 = params[6]
    w7p = jnp.zeros((FEATS[6], OUT_PAD), jnp.float32).at[:, :FEATS[7]].set(w7.T)
    bias_packed = bias_packed.at[0, BIAS_OFFS[6]:BIAS_OFFS[6] + FEATS[7]].set(b7)
    return wpack.astype(jnp.bfloat16), w7p.astype(jnp.bfloat16), bias_packed


@functools.partial(jax.jit, static_argnames=("num_graphs",))
def mlp_forward(x_s, x_t, xs_batch, xt_batch, wpack, w7, bias_packed,
                num_graphs):
    assert num_graphs <= B_PAD
    xs_b = xs_batch.reshape(1, -1).astype(jnp.int32)        # (1, Ns)
    xt_b = xt_batch.reshape(1, -1).astype(jnp.int32)        # (1, Nt)
    inputs = (xs_b, xt_b, x_s, x_t, wpack, w7, bias_packed)
    out_shape = (jax.ShapeDtypeStruct((B_PAD, OUT_PAD), jnp.float32),
                 jax.ShapeDtypeStruct((B_PAD, OUT_PAD), jnp.float32))
    y_pad, sig_pad = pl.pallas_call(
        mlp_kernel,
        out_shape=out_shape,
        in_specs=[pl.BlockSpec(memory_space=pltpu.MemorySpace.VMEM)] * len(inputs),
        out_specs=(pl.BlockSpec(memory_space=pltpu.MemorySpace.VMEM),
                   pl.BlockSpec(memory_space=pltpu.MemorySpace.VMEM)),
    )(*inputs)
    return y_pad[:num_graphs, :FEATS[-1]], sig_pad[:num_graphs, :FEATS[-1]]


# --------------------------- references & setup ---------------------------

def _pool_matrix(batch, num_rows):
    onehot = (batch[None, :] == jnp.arange(num_rows)[:, None]).astype(jnp.float32)
    counts = jnp.maximum(onehot.sum(axis=1, keepdims=True), 1.0)
    return onehot / counts


def init_params(key):
    params = []
    for i in range(7):
        fin, fout = FEATS[i], FEATS[i + 1]
        key, kw, kb, kg, kbe = jax.random.split(key, 5)
        bound = 1.0 / float(fin) ** 0.5
        w = jax.random.uniform(kw, (fout, fin), jnp.float32, -bound, bound)
        b = jax.random.uniform(kb, (fout,), jnp.float32, -bound, bound)
        if i < 6:
            gamma = jax.random.uniform(kg, (fout,), jnp.float32, 0.5, 1.5)
            beta = jax.random.uniform(kbe, (fout,), jnp.float32, -0.5, 0.5)
            rm = jnp.zeros((fout,), jnp.float32)
            rv = jnp.ones((fout,), jnp.float32)
            params.append((w, b, gamma, beta, rm, rv))
        else:
            params.append((w, b))
    return params


def ref_forward(x_s, x_t, xs_batch, xt_batch, params, num_graphs):
    """Original module semantics (eval mode): f32 weights, explicit BN."""
    h = (_pool_matrix(xs_batch, num_graphs) @ x_s
         + _pool_matrix(xt_batch, num_graphs) @ x_t)
    for i in range(6):
        w, b, gamma, beta, rm, rv = params[i]
        y = h @ w.T + b
        y = gamma * (y - rm) / jnp.sqrt(rv + 1e-5) + beta
        h = jnp.maximum(y, 0.0)
    w7, b7 = params[6]
    y = h @ w7.T + b7
    return y, jax.nn.sigmoid(y)


def ref_forward_prepared(x_s, x_t, xs_batch, xt_batch, wpack, w7, bias_packed,
                         num_graphs):
    """Same math path as the kernel: folded BN, bf16 activations x bf16 weights
    with f32 accumulation, padded final layer."""
    h = (_pool_matrix(xs_batch, num_graphs) @ x_s
         + _pool_matrix(xt_batch, num_graphs) @ x_t)
    for i in range(6):
        w = wpack[WROW[i]:WROW[i] + FEATS[i], :FEATS[i + 1]]
        b = bias_packed[0, BIAS_OFFS[i]:BIAS_OFFS[i] + FEATS[i + 1]]
        y = jnp.dot(h.astype(jnp.bfloat16), w,
                    preferred_element_type=jnp.float32) + b
        h = jnp.maximum(y, 0.0)
    b = bias_packed[0, BIAS_OFFS[6]:BIAS_OFFS[6] + OUT_PAD]
    y = jnp.dot(h.astype(jnp.bfloat16), w7,
                preferred_element_type=jnp.float32) + b
    return y[:, :FEATS[-1]], jax.nn.sigmoid(y)[:, :FEATS[-1]]


if __name__ == "__main__":
    key = jax.random.PRNGKey(0)
    kp, ks, kt = jax.random.split(key, 3)
    params = init_params(kp)
    wpack, w7, bias_packed = prepare_params(params)   # one-time prep

    B, Ns, Nt = 4, 32, 32
    x_s = jax.random.normal(ks, (Ns, FEATS[0]), jnp.float32)
    x_t = jax.random.normal(kt, (Nt, FEATS[0]), jnp.float32)
    xs_batch = jnp.repeat(jnp.arange(B), Ns // B)
    xt_batch = jnp.repeat(jnp.arange(B), Nt // B)

    y, sig = mlp_forward(x_s, x_t, xs_batch, xt_batch, wpack, w7, bias_packed,
                         num_graphs=B)
    jax.block_until_ready((y, sig))

    # Tight check vs. identical-math JAX reference (same bf16 path).
    y_p, sig_p = ref_forward_prepared(x_s, x_t, xs_batch, xt_batch,
                                      wpack, w7, bias_packed, B)
    assert jnp.allclose(y, y_p, atol=3e-3, rtol=3e-3)
    assert jnp.allclose(sig, sig_p, atol=3e-3, rtol=3e-3)

    # Loose check vs. original module semantics (f32, unfolded BN); tolerance
    # accounts for bf16 weights + bf16 activations in the kernel path.
    y_r, sig_r = ref_forward(x_s, x_t, xs_batch, xt_batch, params, B)
    assert jnp.allclose(y, y_r, atol=1e-1, rtol=1e-1)
    assert jnp.allclose(sig, sig_r, atol=3e-2, rtol=3e-2)
    print("KERNEL_OK")
</pallas_src>

<mosaic_0001>
module attributes {stable_mosaic.version = 11 : i64} {
  func.func @mlp_kernel(%arg0: memref<1x32xi32, #tpu.memory_space<vmem>>, %arg1: memref<1x32xi32, #tpu.memory_space<vmem>>, %arg2: memref<32x86xf32, #tpu.memory_space<vmem>>, %arg3: memref<32x86xf32, #tpu.memory_space<vmem>>, %arg4: memref<272x128xbf16, #tpu.memory_space<vmem>>, %arg5: memref<80x1408xbf16, #tpu.memory_space<vmem>>, %arg6: memref<1x2176xf32, #tpu.memory_space<vmem>>, %arg7: memref<8x1408xf32, #tpu.memory_space<vmem>>, %arg8: memref<8x1408xf32, #tpu.memory_space<vmem>>) attributes {dimension_semantics = [], scalar_prefetch = 0 : i64, scratch_operands = 0 : i64, tpu.core_type = #tpu.core_type<tc>} {
    %c0 = arith.constant 0 : index
    %c0_0 = arith.constant 0 : index
    %0 = vector.load %arg0[%c0, %c0_0] : memref<1x32xi32, #tpu.memory_space<vmem>>, vector<1x32xi32>
    %1 = tpu.iota {dimensions = array<i32: 0>} : vector<8x32xi32>
    %2 = vector.broadcast %0 : vector<1x32xi32> to vector<8x32xi32>
    %3 = arith.cmpi eq, %2, %1 : vector<8x32xi32>
    %4 = arith.extui %3 : vector<8x32xi1> to vector<8x32xi32>
    %5 = arith.sitofp %4 : vector<8x32xi32> to vector<8x32xf32>
    %cst = arith.constant dense<0.000000e+00> : vector<8xf32>
    %6 = vector.multi_reduction <add>, %5, %cst [1] : vector<8x32xf32> to vector<8xf32>
    %7 = vector.shape_cast %6 : vector<8xf32> to vector<8x1xf32>
    %cst_1 = arith.constant 1.000000e+00 : f32
    %8 = vector.broadcast %cst_1 : f32 to vector<8x1xf32>
    %9 = arith.maximumf %7, %8 : vector<8x1xf32>
    %10 = vector.broadcast %9 : vector<8x1xf32> to vector<8x32xf32>
    %11 = arith.divf %5, %10 : vector<8x32xf32>
    %c0_2 = arith.constant 0 : index
    %c0_3 = arith.constant 0 : index
    %12 = vector.load %arg2[%c0_2, %c0_3] : memref<32x86xf32, #tpu.memory_space<vmem>>, vector<32x86xf32>
    %cst_4 = arith.constant dense<0.000000e+00> : vector<8x86xf32>
    %13 = tpu.matmul %11, %12, %cst_4 {dimension_numbers = #tpu.dot_dimension_numbers<[1], [0], [0], [1], [0, 0, 1, 1], [], []>} : vector<8x32xf32>, vector<32x86xf32>, vector<8x86xf32> -> vector<8x86xf32>
    %c0_5 = arith.constant 0 : index
    %c0_6 = arith.constant 0 : index
    %14 = vector.load %arg1[%c0_5, %c0_6] : memref<1x32xi32, #tpu.memory_space<vmem>>, vector<1x32xi32>
    %15 = tpu.iota {dimensions = array<i32: 0>} : vector<8x32xi32>
    %16 = vector.broadcast %14 : vector<1x32xi32> to vector<8x32xi32>
    %17 = arith.cmpi eq, %16, %15 : vector<8x32xi32>
    %18 = arith.extui %17 : vector<8x32xi1> to vector<8x32xi32>
    %19 = arith.sitofp %18 : vector<8x32xi32> to vector<8x32xf32>
    %cst_7 = arith.constant dense<0.000000e+00> : vector<8xf32>
    %20 = vector.multi_reduction <add>, %19, %cst_7 [1] : vector<8x32xf32> to vector<8xf32>
    %21 = vector.shape_cast %20 : vector<8xf32> to vector<8x1xf32>
    %cst_8 = arith.constant 1.000000e+00 : f32
    %22 = vector.broadcast %cst_8 : f32 to vector<8x1xf32>
    %23 = arith.maximumf %21, %22 : vector<8x1xf32>
    %24 = vector.broadcast %23 : vector<8x1xf32> to vector<8x32xf32>
    %25 = arith.divf %19, %24 : vector<8x32xf32>
    %c0_9 = arith.constant 0 : index
    %c0_10 = arith.constant 0 : index
    %26 = vector.load %arg3[%c0_9, %c0_10] : memref<32x86xf32, #tpu.memory_space<vmem>>, vector<32x86xf32>
    %cst_11 = arith.constant dense<0.000000e+00> : vector<8x86xf32>
    %27 = tpu.matmul %25, %26, %cst_11 {dimension_numbers = #tpu.dot_dimension_numbers<[1], [0], [0], [1], [0, 0, 1, 1], [], []>} : vector<8x32xf32>, vector<32x86xf32>, vector<8x86xf32> -> vector<8x86xf32>
    %28 = arith.addf %13, %27 : vector<8x86xf32>
    %c0_12 = arith.constant 0 : index
    %c0_13 = arith.constant 0 : index
    %29 = vector.load %arg4[%c0_12, %c0_13] : memref<272x128xbf16, #tpu.memory_space<vmem>>, vector<86x43xbf16>
    %c0_14 = arith.constant 0 : index
    %c0_15 = arith.constant 0 : index
    %30 = vector.load %arg6[%c0_14, %c0_15] : memref<1x2176xf32, #tpu.memory_space<vmem>>, vector<1x43xf32>
    %31 = arith.truncf %28 : vector<8x86xf32> to vector<8x86xbf16>
    %cst_16 = arith.constant dense<0.000000e+00> : vector<8x43xf32>
    %32 = tpu.matmul %31, %29, %cst_16 {dimension_numbers = #tpu.dot_dimension_numbers<[1], [0], [0], [1], [0, 0, 1, 1], [], []>} : vector<8x86xbf16>, vector<86x43xbf16>, vector<8x43xf32> -> vector<8x43xf32>
    %33 = vector.broadcast %30 : vector<1x43xf32> to vector<8x43xf32>
    %34 = arith.addf %32, %33 : vector<8x43xf32>
    %cst_17 = arith.constant 0.000000e+00 : f32
    %35 = vector.broadcast %cst_17 : f32 to vector<8x43xf32>
    %36 = arith.maximumf %34, %35 : vector<8x43xf32>
    %c96 = arith.constant 96 : index
    %c0_18 = arith.constant 0 : index
    %37 = vector.load %arg4[%c96, %c0_18] : memref<272x128xbf16, #tpu.memory_space<vmem>>, vector<43x21xbf16>
    %c0_19 = arith.constant 0 : index
    %c128 = arith.constant 128 : index
    %38 = vector.load %arg6[%c0_19, %c128] : memref<1x2176xf32, #tpu.memory_space<vmem>>, vector<1x21xf32>
    %39 = arith.truncf %36 : vector<8x43xf32> to vector<8x43xbf16>
    %cst_20 = arith.constant dense<0.000000e+00> : vector<8x21xf32>
    %40 = tpu.matmul %39, %37, %cst_20 {dimension_numbers = #tpu.dot_dimension_numbers<[1], [0], [0], [1], [0, 0, 1, 1], [], []>} : vector<8x43xbf16>, vector<43x21xbf16>, vector<8x21xf32> -> vector<8x21xf32>
    %41 = vector.broadcast %38 : vector<1x21xf32> to vector<8x21xf32>
    %42 = arith.addf %40, %41 : vector<8x21xf32>
    %cst_21 = arith.constant 0.000000e+00 : f32
    %43 = vector.broadcast %cst_21 : f32 to vector<8x21xf32>
    %44 = arith.maximumf %42, %43 : vector<8x21xf32>
    %c144 = arith.constant 144 : index
    %c0_22 = arith.constant 0 : index
    %45 = vector.load %arg4[%c144, %c0_22] : memref<272x128xbf16, #tpu.memory_space<vmem>>, vector<21x10xbf16>
    %c0_23 = arith.constant 0 : index
    %c256 = arith.constant 256 : index
    %46 = vector.load %arg6[%c0_23, %c256] : memref<1x2176xf32, #tpu.memory_space<vmem>>, vector<1x10xf32>
    %47 = arith.truncf %44 : vector<8x21xf32> to vector<8x21xbf16>
    %cst_24 = arith.constant dense<0.000000e+00> : vector<8x10xf32>
    %48 = tpu.matmul %47, %45, %cst_24 {dimension_numbers = #tpu.dot_dimension_numbers<[1], [0], [0], [1], [0, 0, 1, 1], [], []>} : vector<8x21xbf16>, vector<21x10xbf16>, vector<8x10xf32> -> vector<8x10xf32>
    %49 = vector.broadcast %46 : vector<1x10xf32> to vector<8x10xf32>
    %50 = arith.addf %48, %49 : vector<8x10xf32>
    %cst_25 = arith.constant 0.000000e+00 : f32
    %51 = vector.broadcast %cst_25 : f32 to vector<8x10xf32>
    %52 = arith.maximumf %50, %51 : vector<8x10xf32>
    %c176 = arith.constant 176 : index
    %c0_26 = arith.constant 0 : index
    %53 = vector.load %arg4[%c176, %c0_26] : memref<272x128xbf16, #tpu.memory_space<vmem>>, vector<10x20xbf16>
    %c0_27 = arith.constant 0 : index
    %c384 = arith.constant 384 : index
    %54 = vector.load %arg6[%c0_27, %c384] : memref<1x2176xf32, #tpu.memory_space<vmem>>, vector<1x20xf32>
    %55 = arith.truncf %52 : vector<8x10xf32> to vector<8x10xbf16>
    %cst_28 = arith.constant dense<0.000000e+00> : vector<8x20xf32>
    %56 = tpu.matmul %55, %53, %cst_28 {dimension_numbers = #tpu.dot_dimension_numbers<[1], [0], [0], [1], [0, 0, 1, 1], [], []>} : vector<8x10xbf16>, vector<10x20xbf16>, vector<8x20xf32> -> vector<8x20xf32>
    %57 = vector.broadcast %54 : vector<1x20xf32> to vector<8x20xf32>
    %58 = arith.addf %56, %57 : vector<8x20xf32>
    %cst_29 = arith.constant 0.000000e+00 : f32
    %59 = vector.broadcast %cst_29 : f32 to vector<8x20xf32>
    %60 = arith.maximumf %58, %59 : vector<8x20xf32>
    %c192 = arith.constant 192 : index
    %c0_30 = arith.constant 0 : index
    %61 = vector.load %arg4[%c192, %c0_30] : memref<272x128xbf16, #tpu.memory_space<vmem>>, vector<20x40xbf16>
    %c0_31 = arith.constant 0 : index
    %c512 = arith.constant 512 : index
    %62 = vector.load %arg6[%c0_31, %c512] : memref<1x2176xf32, #tpu.memory_space<vmem>>, vector<1x40xf32>
    %63 = arith.truncf %60 : vector<8x20xf32> to vector<8x20xbf16>
    %cst_32 = arith.constant dense<0.000000e+00> : vector<8x40xf32>
    %64 = tpu.matmul %63, %61, %cst_32 {dimension_numbers = #tpu.dot_dimension_numbers<[1], [0], [0], [1], [0, 0, 1, 1], [], []>} : vector<8x20xbf16>, vector<20x40xbf16>, vector<8x40xf32> -> vector<8x40xf32>
    %65 = vector.broadcast %62 : vector<1x40xf32> to vector<8x40xf32>
    %66 = arith.addf %64, %65 : vector<8x40xf32>
    %cst_33 = arith.constant 0.000000e+00 : f32
    %67 = vector.broadcast %cst_33 : f32 to vector<8x40xf32>
    %68 = arith.maximumf %66, %67 : vector<8x40xf32>
    %c224 = arith.constant 224 : index
    %c0_34 = arith.constant 0 : index
    %69 = vector.load %arg4[%c224, %c0_34] : memref<272x128xbf16, #tpu.memory_space<vmem>>, vector<40x80xbf16>
    %c0_35 = arith.constant 0 : index
    %c640 = arith.constant 640 : index
    %70 = vector.load %arg6[%c0_35, %c640] : memref<1x2176xf32, #tpu.memory_space<vmem>>, vector<1x80xf32>
    %71 = arith.truncf %68 : vector<8x40xf32> to vector<8x40xbf16>
    %cst_36 = arith.constant dense<0.000000e+00> : vector<8x80xf32>
    %72 = tpu.matmul %71, %69, %cst_36 {dimension_numbers = #tpu.dot_dimension_numbers<[1], [0], [0], [1], [0, 0, 1, 1], [], []>} : vector<8x40xbf16>, vector<40x80xbf16>, vector<8x80xf32> -> vector<8x80xf32>
    %73 = vector.broadcast %70 : vector<1x80xf32> to vector<8x80xf32>
    %74 = arith.addf %72, %73 : vector<8x80xf32>
    %cst_37 = arith.constant 0.000000e+00 : f32
    %75 = vector.broadcast %cst_37 : f32 to vector<8x80xf32>
    %76 = arith.maximumf %74, %75 : vector<8x80xf32>
    %c0_38 = arith.constant 0 : index
    %c768 = arith.constant 768 : index
    %77 = vector.load %arg6[%c0_38, %c768] : memref<1x2176xf32, #tpu.memory_space<vmem>>, vector<1x1408xf32>
    %78 = arith.truncf %76 : vector<8x80xf32> to vector<8x80xbf16>
    %c0_39 = arith.constant 0 : index
    %c0_40 = arith.constant 0 : index
    %79 = vector.load %arg5[%c0_39, %c0_40] : memref<80x1408xbf16, #tpu.memory_space<vmem>>, vector<80x1408xbf16>
    %cst_41 = arith.constant dense<0.000000e+00> : vector<8x1408xf32>
    %80 = tpu.matmul %78, %79, %cst_41 {dimension_numbers = #tpu.dot_dimension_numbers<[1], [0], [0], [1], [0, 0, 1, 1], [], []>} : vector<8x80xbf16>, vector<80x1408xbf16>, vector<8x1408xf32> -> vector<8x1408xf32>
    %81 = vector.broadcast %77 : vector<1x1408xf32> to vector<8x1408xf32>
    %82 = arith.addf %80, %81 : vector<8x1408xf32>
    %c0_42 = arith.constant 0 : index
    %c0_43 = arith.constant 0 : index
    %83 = vector.load %arg7[%c0_42, %c0_43] : memref<8x1408xf32, #tpu.memory_space<vmem>>, vector<8x1408xf32>
    tpu.vector_store %arg7[%c0_42, %c0_43], %82 {strides = array<i32>} : memref<8x1408xf32, #tpu.memory_space<vmem>>, vector<8x1408xf32>,
    %cst_44 = arith.constant 0.000000e+00 : f32
    %84 = vector.broadcast %cst_44 : f32 to vector<8x1408xf32>
    %85 = arith.subf %84, %82 : vector<8x1408xf32>
    %86 = math.exp %85 : vector<8x1408xf32>
    %cst_45 = arith.constant 1.000000e+00 : f32
    %87 = vector.broadcast %cst_45 : f32 to vector<8x1408xf32>
    %88 = arith.addf %87, %86 : vector<8x1408xf32>
    %89 = tpu.reciprocal %88 {approx = true} : vector<8x1408xf32> -> vector<8x1408xf32>
    %c0_46 = arith.constant 0 : index
    %c0_47 = arith.constant 0 : index
    %90 = vector.load %arg8[%c0_46, %c0_47] : memref<8x1408xf32, #tpu.memory_space<vmem>>, vector<8x1408xf32>
    tpu.vector_store %arg8[%c0_46, %c0_47], %89 {strides = array<i32>} : memref<8x1408xf32, #tpu.memory_space<vmem>>, vector<8x1408xf32>,
    return
  }
}

</mosaic_0001>

<llo_original>
// kernel: mlp_forward.1
$region0: #{mlp_forward.1}
  #allocation0 [shape = 'u32[]', space=smem, size = 0x4, offset = 0x4, fixed_abs, tag = 'smem constant byte address 0x4 - core index']
  #allocation1 [shape = 'u32[144,128]{1,0:T(1,128)}', space=vmem, size = 0x12000, scoped, tag = 'internal scratch']
  %s0 = inlined_call_operand.vmem [shape: s32[1,32], index: 0, kind: input, shape index: {}]
  %s1 = inlined_call_operand.vmem [shape: s32[1,32], index: 1, kind: input, shape index: {}]
  %s2 = inlined_call_operand.hbm [shape: f32[32,86], index: 2, kind: input, shape index: {}]
  %s3 = inlined_call_operand.hbm [shape: f32[32,86], index: 3, kind: input, shape index: {}]
  %s4 = inlined_call_operand.hbm [shape: bf16[272,128], index: 4, kind: input, shape index: {}]
  %s5 = inlined_call_operand.hbm [shape: bf16[80,1408], index: 5, kind: input, shape index: {}]
  %s6 = inlined_call_operand.vmem [shape: f32[1,2176], index: 6, kind: input, shape index: {}]
  %s7 = inlined_call_operand.vmem [shape: f32[8,1408], index: 7, kind: output, shape index: {0}]
  %s8 = inlined_call_operand.vmem [shape: f32[8,1408], index: 8, kind: output, shape index: {1}]
  %9 = xla_tuple %s7, %s8
  %s10 = sld [smem:[#allocation0]]
  $region62: #{mlp_forward.1} parent=0
    _
  %s12 = ssub.s32 1, %s10
  %s13 = scalar_select 0, %s12, %s10
  $region1: #{mlp_forward.1} parent=0
    #allocation2 [shape = 'u8[16384]{0}', space=vmem, size = 0x4000, scoped, tag = 'input window, operand 2, single buffered']
    #allocation3 [shape = 's32[1]{0}', space=sflag, size = 0x4, scoped, tag = 'scoped memory for mlp_forward.1']
    #allocation4 [shape = 'u8[16384]{0}', space=vmem, size = 0x4000, scoped, tag = 'input window, operand 3, single buffered']
    #allocation5 [shape = 's32[1]{0}', space=sflag, size = 0x4, scoped, tag = 'scoped memory for mlp_forward.1']
    #allocation6 [shape = 'u8[69632]{0}', space=vmem, size = 0x11000, scoped, tag = 'input window, operand 4, single buffered']
    #allocation7 [shape = 'u8[225280]{0}', space=vmem, size = 0x37000, scoped, tag = 'input window, operand 5, single buffered']
    #allocation8 [shape = 's32[1]{0}', space=sflag, size = 0x4, scoped, tag = 'scoped memory for mlp_forward.1']
    %14 = vsyncpa [#allocation3], 0
    %15 = vsyncpa [#allocation5], 0
    %16 = vsyncpa [#allocation8], 0
    // Predicated region
    $region2: #{mlp_forward.1} parent=1 // pred_check
      _
    $region3: #{mlp_forward.1} parent=1 // pred_check_branch
      %18 = sbr.rel (0) target = $region5
    $region4: #{mlp_forward.1} parent=1 // pred_region
      _
    $region5: #{mlp_forward.1} parent=1 // pred_fallthru
      _
    // Predicated region
    $region6: #{mlp_forward.1} parent=1 // pred_check
      _
    $region7: #{mlp_forward.1} parent=1 // pred_check_branch
      %20 = sbr.rel (0) target = $region9
    $region8: #{mlp_forward.1} parent=1 // pred_region
      _
    $region9: #{mlp_forward.1} parent=1 // pred_fallthru
      _
    // Predicated region
    $region10: #{mlp_forward.1} parent=1 // pred_check
      _
    $region11: #{mlp_forward.1} parent=1 // pred_check_branch
      %22 = sbr.rel (0) target = $region13
    $region12: #{mlp_forward.1} parent=1 // pred_region
      %s24 = ssub.s32 512, 512
      %25 = vsyncadd [#allocation3], %s24
      %s26 = sshll.u32 [#allocation2], 4
      %s27 = int_to_ptr.vmem [resolvable:$true] %s26
      %32 = dma.hbm_to_vmem [thread:$0]  %s2, 512, %s27, [#allocation3], 128, 128, 8
    $region13: #{mlp_forward.1} parent=1 // pred_fallthru
      _
    // Predicated region
    $region14: #{mlp_forward.1} parent=1 // pred_check
      _
    $region15: #{mlp_forward.1} parent=1 // pred_check_branch
      %34 = sbr.rel (0) target = $region17
    $region16: #{mlp_forward.1} parent=1 // pred_region
      %s36 = ssub.s32 512, 512
      %37 = vsyncadd [#allocation5], %s36
      %s38 = sshll.u32 [#allocation4], 4
      %s39 = int_to_ptr.vmem [resolvable:$true] %s38
      %44 = dma.hbm_to_vmem [thread:$0]  %s3, 512, %s39, [#allocation5], 128, 128, 8
    $region17: #{mlp_forward.1} parent=1 // pred_fallthru
      _
    // Predicated region
    $region18: #{mlp_forward.1} parent=1 // pred_check
      _
    $region19: #{mlp_forward.1} parent=1 // pred_check_branch
      %46 = sbr.rel (0) target = $region21
    $region20: #{mlp_forward.1} parent=1 // pred_region
      %s48 = ssub.s32 2176, 2176
      %49 = vsyncadd [#allocation5], %s48
      %s50 = sshll.u32 [#allocation6], 4
      %s51 = int_to_ptr.vmem [resolvable:$true] %s50
      %56 = dma.hbm_to_vmem [thread:$0]  %s4, 2176, %s51, [#allocation5], 64, 64, 4
    $region21: #{mlp_forward.1} parent=1 // pred_fallthru
      _
    // Predicated region
    $region22: #{mlp_forward.1} parent=1 // pred_check
      _
    $region23: #{mlp_forward.1} parent=1 // pred_check_branch
      %58 = sbr.rel (0) target = $region25
    $region24: #{mlp_forward.1} parent=1 // pred_region
      %s60 = ssub.s32 7040, 7040
      %61 = vsyncadd [#allocation8], %s60
      %s62 = sshll.u32 [#allocation7], 4
      %s63 = int_to_ptr.vmem [resolvable:$true] %s62
      %68 = dma.hbm_to_vmem [thread:$0]  %s5, 7040, %s63, [#allocation8], 704, 704, 44
    $region25: #{mlp_forward.1} parent=1 // pred_fallthru
      _
    // Predicated region
    $region26: #{mlp_forward.1} parent=1 // pred_check
      _
    $region27: #{mlp_forward.1} parent=1 // pred_check_branch
      %70 = sbr.rel (0) target = $region29
    $region28: #{mlp_forward.1} parent=1 // pred_region
      _
    $region29: #{mlp_forward.1} parent=1 // pred_fallthru
      _
    // Predicated region
    $region30: #{mlp_forward.1} parent=1 // pred_check
      _
    $region31: #{mlp_forward.1} parent=1 // pred_check_branch
      %72 = sbr.rel (0) target = $region33
    $region32: #{mlp_forward.1} parent=1 // pred_region
      %73 = dma.done [#allocation3], 512
    $region33: #{mlp_forward.1} parent=1 // pred_fallthru
      _
    // Predicated region
    $region34: #{mlp_forward.1} parent=1 // pred_check
      _
    $region35: #{mlp_forward.1} parent=1 // pred_check_branch
      %75 = sbr.rel (0) target = $region37
    $region36: #{mlp_forward.1} parent=1 // pred_region
      %76 = dma.done [#allocation5], 512
    $region37: #{mlp_forward.1} parent=1 // pred_fallthru
      _
    // Predicated region
    $region38: #{mlp_forward.1} parent=1 // pred_check
      _
    $region39: #{mlp_forward.1} parent=1 // pred_check_branch
      %78 = sbr.rel (0) target = $region41
    $region40: #{mlp_forward.1} parent=1 // pred_region
      %79 = dma.done [#allocation5], 2176
    $region41: #{mlp_forward.1} parent=1 // pred_fallthru
      _
    // Predicated region
    $region42: #{mlp_forward.1} parent=1 // pred_check
      _
    $region43: #{mlp_forward.1} parent=1 // pred_check_branch
      %81 = sbr.rel (0) target = $region45
    $region44: #{mlp_forward.1} parent=1 // pred_region
      %82 = dma.done [#allocation8], 7040
    $region45: #{mlp_forward.1} parent=1 // pred_fallthru
      _
    %v84 = vld [vmem:[%s0] sm:$0x1]
    %v85 = vlaneseq
    %v86 = vshrl.u32 %v85, 7
    %v87 = vlaneseq
    %v88 = vshrl.u32 %v87, 7
    %v89 = vsub.s32 0, %v88
    %v90 = vrot.slane %v84, %v89
    %vm91 = vcmp.eq.s32.totalorder %v90, %v86
    %v92 = vsel %vm91, 1, 0
    %v93 = vcvt.s32.f32 %v92
    %vm94 = vcmask 261120
    %v95 = vsel %vm94, %v93, 0.0
    %96 = vadd.xlane.f32.xlu0 %v95
    %v97 = vpop.xlane.xlu0 %96
    %v98 = vmax.f32 %v97, 1.0
    %v99 = vrcp.pop %v98
    %v100 = vmul.f32 %v93, %v99
    %v101 = vld [vmem:[#allocation2] sm:$0xff]
    %v102 = vld [vmem:[#allocation2 + $0x8] sm:$0xff]
    %v103 = vld [vmem:[#allocation2 + $0x10] sm:$0xff]
    %v104 = vld [vmem:[#allocation2 + $0x18] sm:$0xff]
    %v105 = vld [vmem:[%s1] sm:$0x1]
    %v106 = vlaneseq
    %v107 = vshrl.u32 %v106, 7
    %v108 = vsub.s32 0, %v107
    %v109 = vrot.slane %v105, %v108
    %vm110 = vcmp.eq.s32.totalorder %v109, %v86
    %v111 = vsel %vm110, 1, 0
    %v112 = vcvt.s32.f32 %v111
    %v113 = vsel %vm94, %v112, 0.0
    %114 = vadd.xlane.f32.xlu0 %v113
    %v115 = vpop.xlane.xlu0 %114
    %v116 = vmax.f32 %v115, 1.0
    %v117 = vrcp.pop %v116
    %v118 = vmul.f32 %v112, %v117
    %v119 = vld [vmem:[#allocation4] sm:$0xff]
    %v120 = vld [vmem:[#allocation4 + $0x8] sm:$0xff]
    %v121 = vld [vmem:[#allocation4 + $0x10] sm:$0xff]
    %v122 = vld [vmem:[#allocation4 + $0x18] sm:$0xff]
    %v124 = vsel %vm94, %v118, 0
    %126 = vmatprep.subr.mxu0 0.0
    %127 = vmatpush1.msra.mxu0 %v119
    %128 = vmatprep.subr.mxu0 0.0
    %129 = vmatpush1.msra.mxu0 %v120
    %130 = vmatprep.subr.mxu0 0.0
    %131 = vmatpush1.msra.mxu0 %v121
    %132 = vmatprep.subr.mxu0 0.0
    %133 = vmatpush1.msra.mxu0 %v122
    %134 = vmatprep.subr.mxu0 0.0
    %135 = vmatpush1.msra.mxu0 0.0
    %136 = vmatprep.subr.mxu0 0.0
    %137 = vmatpush1.msra.mxu0 0.0
    %138 = vmatprep.subr.mxu0 0.0
    %139 = vmatpush1.msra.mxu0 0.0
    %140 = vmatprep.subr.mxu0 0.0
    %141 = vmatpush1.msra.mxu0 0.0
    %142 = vmatprep.subr.mxu0 0.0
    %143 = vmatpush1.msra.mxu0 0.0
    %144 = vmatprep.subr.mxu0 0.0
    %145 = vmatpush1.msra.mxu0 0.0
    %146 = vmatprep.subr.mxu0 0.0
    %147 = vmatpush1.msra.mxu0 0.0
    %148 = vmatprep.subr.mxu0 0.0
    %149 = vmatpush1.msra.mxu0 0.0
    %150 = vmatprep.subr.mxu0 0.0
    %151 = vmatpush1.msra.mxu0 0.0
    %152 = vmatprep.subr.mxu0 0.0
    %153 = vmatpush1.msra.mxu0 0.0
    %154 = vmatprep.subr.mxu0 0.0
    %155 = vmatpush1.msra.mxu0 0.0
    %156 = vmatprep.subr.mxu0 0.0
    %157 = vmatpush1.msra.mxu0 0.0
    %158 = vmatprep.subr.mxu0 0.0
    %159 = vmatpush1.msra.mxu0 0.0
    %160 = vmatprep.subr.mxu0 0.0
    %161 = vmatpush1.msra.mxu0 0.0
    %162 = vmatprep.subr.mxu0 0.0
    %163 = vmatpush1.msra.mxu0 0.0
    %164 = vmatprep.subr.mxu0 0.0
    %165 = vmatpush1.msra.mxu0 0.0
    %166 = vmatprep.subr.mxu0 0.0
    %167 = vmatpush1.msra.mxu0 0.0
    %168 = vmatprep.subr.mxu0 0.0
    %169 = vmatpush1.msra.mxu0 0.0
    %170 = vmatprep.subr.mxu0 0.0
    %171 = vmatpush1.msra.mxu0 0.0
    %172 = vmatprep.subr.mxu0 0.0
    %173 = vmatpush1.msra.mxu0 0.0
    %174 = vmatprep.subr.mxu0 0.0
    %175 = vmatpush1.msra.mxu0 0.0
    %176 = vmatprep.subr.mxu0 0.0
    %177 = vmatpush1.msra.mxu0 0.0
    %178 = vmatprep.subr.mxu0 0.0
    %179 = vmatpush1.msra.mxu0 0.0
    %180 = vmatprep.subr.mxu0 0.0
    %181 = vmatpush1.msra.mxu0 0.0
    %182 = vmatprep.subr.mxu0 0.0
    %183 = vmatpush1.msra.mxu0 0.0
    %184 = vmatprep.subr.mxu0 0.0
    %185 = vmatpush1.msra.mxu0 0.0
    %186 = vmatprep.subr.mxu0 0.0
    %187 = vmatpush1.msra.mxu0 0.0
    %188 = vmatprep.subr.mxu0 0.0
    %189 = vmatpush1.msra.mxu0 0.0
    %190 = vmatprep.mubr.f32.mxu0 0.0
    %191 = vmatmul.mubr.f32.gmra.mrb[0].mxu0 %v124
    %v192 = vpop.f32.mrb[0].mxu0
    %v193 = vadd.f32 0.0, %v192
    %v194 = vpop.f32.mrb[0].mxu0
    %195 = vdwg.mxu0
    %v197 = vsel %vm94, %v100, 0
    %199 = vmatprep.subr.mxu0 0.0
    %200 = vmatpush1.msra.mxu0 %v101
    %201 = vmatprep.subr.mxu0 0.0
    %202 = vmatpush1.msra.mxu0 %v102
    %203 = vmatprep.subr.mxu0 0.0
    %204 = vmatpush1.msra.mxu0 %v103
    %205 = vmatprep.subr.mxu0 0.0
    %206 = vmatpush1.msra.mxu0 %v104
    %207 = vmatprep.subr.mxu0 0.0
    %208 = vmatpush1.msra.mxu0 0.0
    %209 = vmatprep.subr.mxu0 0.0
    %210 = vmatpush1.msra.mxu0 0.0
    %211 = vmatprep.subr.mxu0 0.0
    %212 = vmatpush1.msra.mxu0 0.0
    %213 = vmatprep.subr.mxu0 0.0
    %214 = vmatpush1.msra.mxu0 0.0
    %215 = vmatprep.subr.mxu0 0.0
    %216 = vmatpush1.msra.mxu0 0.0
    %217 = vmatprep.subr.mxu0 0.0
    %218 = vmatpush1.msra.mxu0 0.0
    %219 = vmatprep.subr.mxu0 0.0
    %220 = vmatpush1.msra.mxu0 0.0
    %221 = vmatprep.subr.mxu0 0.0
    %222 = vmatpush1.msra.mxu0 0.0
    %223 = vmatprep.subr.mxu0 0.0
    %224 = vmatpush1.msra.mxu0 0.0
    %225 = vmatprep.subr.mxu0 0.0
    %226 = vmatpush1.msra.mxu0 0.0
    %227 = vmatprep.subr.mxu0 0.0
    %228 = vmatpush1.msra.mxu0 0.0
    %229 = vmatprep.subr.mxu0 0.0
    %230 = vmatpush1.msra.mxu0 0.0
    %231 = vmatprep.subr.mxu0 0.0
    %232 = vmatpush1.msra.mxu0 0.0
    %233 = vmatprep.subr.mxu0 0.0
    %234 = vmatpush1.msra.mxu0 0.0
    %235 = vmatprep.subr.mxu0 0.0
    %236 = vmatpush1.msra.mxu0 0.0
    %237 = vmatprep.subr.mxu0 0.0
    %238 = vmatpush1.msra.mxu0 0.0
    %239 = vmatprep.subr.mxu0 0.0
    %240 = vmatpush1.msra.mxu0 0.0
    %241 = vmatprep.subr.mxu0 0.0
    %242 = vmatpush1.msra.mxu0 0.0
    %243 = vmatprep.subr.mxu0 0.0
    %244 = vmatpush1.msra.mxu0 0.0
    %245 = vmatprep.subr.mxu0 0.0
    %246 = vmatpush1.msra.mxu0 0.0
    %247 = vmatprep.subr.mxu0 0.0
    %248 = vmatpush1.msra.mxu0 0.0
    %249 = vmatprep.subr.mxu0 0.0
    %250 = vmatpush1.msra.mxu0 0.0
    %251 = vmatprep.subr.mxu0 0.0
    %252 = vmatpush1.msra.mxu0 0.0
    %253 = vmatprep.subr.mxu0 0.0
    %254 = vmatpush1.msra.mxu0 0.0
    %255 = vmatprep.subr.mxu0 0.0
    %256 = vmatpush1.msra.mxu0 0.0
    %257 = vmatprep.subr.mxu0 0.0
    %258 = vmatpush1.msra.mxu0 0.0
    %259 = vmatprep.subr.mxu0 0.0
    %260 = vmatpush1.msra.mxu0 0.0
    %261 = vmatprep.subr.mxu0 0.0
    %262 = vmatpush1.msra.mxu0 0.0
    %263 = vmatprep.mubr.f32.mxu0 0.0
    %264 = vmatmul.mubr.f32.gmra.mrb[0].mxu0 %v197
    %v265 = vpop.f32.mrb[0].mxu0
    %v266 = vadd.f32 %v193, %v265
    %v267 = vpop.f32.mrb[0].mxu0
    %268 = vdwg.mxu0
    %v269 = vld [vmem:[#allocation6] sm:$0xf]
    %v270 = vld [vmem:[#allocation6 + $0x4] sm:$0xf]
    %v271 = vld [vmem:[#allocation6 + $0x8] sm:$0xf]
    %v272 = vld [vmem:[#allocation6 + $0xc] sm:$0xf]
    %v273 = vld [vmem:[#allocation6 + $0x10] sm:$0xf]
    %v274 = vld [vmem:[#allocation6 + $0x14] sm:$0xf]
    %v275 = vld [vmem:[#allocation6 + $0x18] sm:$0xf]
    %v276 = vld [vmem:[#allocation6 + $0x1c] sm:$0xf]
    %v277 = vld [vmem:[#allocation6 + $0x20] sm:$0xf]
    %v278 = vld [vmem:[#allocation6 + $0x24] sm:$0xf]
    %v279 = vld [vmem:[#allocation6 + $0x28] sm:$0x7]
    %v280 = vld [vmem:[%s6] sm:$0x1]
    %v281 = vpack.c.bf16 %v266, %v266
    %v283 = vlaneseq
    %v284 = vshrl.u32 %v283, 7
    %v285 = vsub.s32 0, %v284
    %v286 = vrot.slane %v280, %v285
    %v299 = vunpack.c.l.b16 %v269
    %v300 = vunpack.c.l.b16 %v270
    %v301 = vunpack.c.l.b16 %v271
    %v302 = vunpack.c.l.b16 %v272
    %v303 = vunpack.c.l.b16 %v273
    %v304 = vunpack.c.l.b16 %v274
    %v305 = vunpack.c.l.b16 %v275
    %v306 = vunpack.c.l.b16 %v276
    %v307 = vunpack.c.l.b16 %v277
    %v308 = vunpack.c.l.b16 %v278
    %v309 = vunpack.c.l.b16 %v279
    %v310 = vpack.c.b16 %v300, %v299
    %v311 = vpack.c.b16 %v302, %v301
    %v312 = vpack.c.b16 %v304, %v303
    %v313 = vpack.c.b16 %v306, %v305
    %v314 = vpack.c.b16 %v308, %v307
    %v315 = vpack.c.b16 %v309, %v309
    %vm321 = vcmask 703488
    %v323 = vsel %vm321, %v281, 0
    %vm325 = vcmask 1042432
    %v327 = vsel %vm325, %v315, 0
    %329 = vmatprep.subr.bf16.mxu0 0
    %330 = vmatpush1.bf16.msra.mxu0 %v310
    %331 = vmatprep.subr.bf16.mxu0 0
    %332 = vmatpush1.bf16.msra.mxu0 %v311
    %333 = vmatprep.subr.bf16.mxu0 0
    %334 = vmatpush1.bf16.msra.mxu0 %v312
    %335 = vmatprep.subr.bf16.mxu0 0
    %336 = vmatpush1.bf16.msra.mxu0 %v313
    %337 = vmatprep.subr.bf16.mxu0 0
    %338 = vmatpush1.bf16.msra.mxu0 %v314
    %339 = vmatprep.subr.bf16.mxu0 0
    %340 = vmatpush1.bf16.msra.mxu0 %v327
    %341 = vmatprep.subr.bf16.mxu0 0
    %342 = vmatpush1.bf16.msra.mxu0 0
    %343 = vmatprep.subr.bf16.mxu0 0
    %344 = vmatpush1.bf16.msra.mxu0 0
    %345 = vmatprep.subr.bf16.mxu0 0
    %346 = vmatpush1.bf16.msra.mxu0 0
    %347 = vmatprep.subr.bf16.mxu0 0
    %348 = vmatpush1.bf16.msra.mxu0 0
    %349 = vmatprep.subr.bf16.mxu0 0
    %350 = vmatpush1.bf16.msra.mxu0 0
    %351 = vmatprep.subr.bf16.mxu0 0
    %352 = vmatpush1.bf16.msra.mxu0 0
    %353 = vmatprep.subr.bf16.mxu0 0
    %354 = vmatpush1.bf16.msra.mxu0 0
    %355 = vmatprep.subr.bf16.mxu0 0
    %356 = vmatpush1.bf16.msra.mxu0 0
    %357 = vmatprep.subr.bf16.mxu0 0
    %358 = vmatpush1.bf16.msra.mxu0 0
    %359 = vmatprep.subr.bf16.mxu0 0
    %360 = vmatpush1.bf16.msra.mxu0 0
    %361 = vmatprep.mubr.bf16.mxu0 0
    %362 = vmatmul.mubr.bf16.gmra.mrb[0].mxu0 %v323
    %v363 = vpop.f32.mrb[0].mxu0
    %v364 = vadd.f32 %v286, %v363
    %v365 = vpop.f32.mrb[0].mxu0
    %v366 = vpop.f32.mrb[0].mxu0
    %v367 = vpop.f32.mrb[0].mxu0
    %368 = vdwg.mxu0
    %v369 = vmax.f32 %v364, 0.0
    %v370 = vld [vmem:[#allocation6 + $0x30] sm:$0xf]
    %v371 = vld [vmem:[#allocation6 + $0x34] sm:$0xf]
    %v372 = vld [vmem:[#allocation6 + $0x38] sm:$0xf]
    %v373 = vld [vmem:[#allocation6 + $0x3c] sm:$0xf]
    %v374 = vld [vmem:[#allocation6 + $0x40] sm:$0xf]
    %v375 = vld [vmem:[#allocation6 + $0x44] sm:$0x3]
    %v376 = vld [vmem:[%s6 + $0x1] sm:$0x1]
    %v377 = vpack.c.bf16 %v369, %v369
    %v379 = vlaneseq
    %v380 = vshrl.u32 %v379, 7
    %v381 = vsub.s32 0, %v380
    %v382 = vrot.slane %v376, %v381
    %v390 = vunpack.c.l.b16 %v370
    %v391 = vunpack.c.l.b16 %v371
    %v392 = vunpack.c.l.b16 %v372
    %v393 = vunpack.c.l.b16 %v373
    %v394 = vunpack.c.l.b16 %v374
    %v395 = vunpack.c.l.b16 %v375
    %v396 = vpack.c.b16 %v391, %v390
    %v397 = vpack.c.b16 %v393, %v392
    %v398 = vpack.c.b16 %v395, %v394
    %vm401 = vcmask 351232
    %v403 = vsel %vm401, %v377, 0
    %vm405 = vcmask 1044480
    %vm406 = vcmask 1045504
    %v407 = vsel %vm405, 4294967295, 65535
    %v408 = vsel %vm406, %v407, 0
    %v410 = vand.u32 %v398, %v408
    %412 = vmatprep.subr.bf16.mxu0 0
    %413 = vmatpush1.bf16.msra.mxu0 %v396
    %414 = vmatprep.subr.bf16.mxu0 0
    %415 = vmatpush1.bf16.msra.mxu0 %v397
    %416 = vmatprep.subr.bf16.mxu0 0
    %417 = vmatpush1.bf16.msra.mxu0 %v410
    %418 = vmatprep.subr.bf16.mxu0 0
    %419 = vmatpush1.bf16.msra.mxu0 0
    %420 = vmatprep.subr.bf16.mxu0 0
    %421 = vmatpush1.bf16.msra.mxu0 0
    %422 = vmatprep.subr.bf16.mxu0 0
    %423 = vmatpush1.bf16.msra.mxu0 0
    %424 = vmatprep.subr.bf16.mxu0 0
    %425 = vmatpush1.bf16.msra.mxu0 0
    %426 = vmatprep.subr.bf16.mxu0 0
    %427 = vmatpush1.bf16.msra.mxu0 0
    %428 = vmatprep.subr.bf16.mxu0 0
    %429 = vmatpush1.bf16.msra.mxu0 0
    %430 = vmatprep.subr.bf16.mxu0 0
    %431 = vmatpush1.bf16.msra.mxu0 0
    %432 = vmatprep.subr.bf16.mxu0 0
    %433 = vmatpush1.bf16.msra.mxu0 0
    %434 = vmatprep.subr.bf16.mxu0 0
    %435 = vmatpush1.bf16.msra.mxu0 0
    %436 = vmatprep.subr.bf16.mxu0 0
    %437 = vmatpush1.bf16.msra.mxu0 0
    %438 = vmatprep.subr.bf16.mxu0 0
    %439 = vmatpush1.bf16.msra.mxu0 0
    %440 = vmatprep.subr.bf16.mxu0 0
    %441 = vmatpush1.bf16.msra.mxu0 0
    %442 = vmatprep.subr.bf16.mxu0 0
    %443 = vmatpush1.bf16.msra.mxu0 0
    %444 = vmatprep.mubr.bf16.mxu0 0
    %445 = vmatmul.mubr.bf16.gmra.mrb[0].mxu0 %v403
    %v446 = vpop.f32.mrb[0].mxu0
    %v447 = vadd.f32 %v382, %v446
    %v448 = vpop.f32.mrb[0].mxu0
    %v449 = vpop.f32.mrb[0].mxu0
    %v450 = vpop.f32.mrb[0].mxu0
    %451 = vdwg.mxu0
    %v452 = vmax.f32 %v447, 0.0
    %v453 = vld [vmem:[#allocation6 + $0x48] sm:$0xf]
    %v454 = vld [vmem:[#allocation6 + $0x4c] sm:$0xf]
    %v455 = vld [vmem:[#allocation6 + $0x50] sm:$0x7]
    %v456 = vld [vmem:[%s6 + $0x2] sm:$0x1]
    %v457 = vpack.c.bf16 %v452, %v452
    %v459 = vlaneseq
    %v460 = vshrl.u32 %v459, 7
    %v461 = vsub.s32 0, %v460
    %v462 = vrot.slane %v456, %v461
    %v467 = vunpack.c.l.b16 %v453
    %v468 = vunpack.c.l.b16 %v454
    %v469 = vunpack.c.l.b16 %v455
    %v470 = vpack.c.b16 %v468, %v467
    %v471 = vpack.c.b16 %v469, %v469
    %vm473 = vcmask 171008
    %v475 = vsel %vm473, %v457, 0
    %vm477 = vcmask 1041408
    %v478 = vsel %vm477, 4294967295, 65535
    %v479 = vsel %vm325, %v478, 0
    %v481 = vand.u32 %v471, %v479
    %483 = vmatprep.subr.bf16.mxu0 0
    %484 = vmatpush1.bf16.msra.mxu0 %v470
    %485 = vmatprep.subr.bf16.mxu0 0
    %486 = vmatpush1.bf16.msra.mxu0 %v481
    %487 = vmatprep.subr.bf16.mxu0 0
    %488 = vmatpush1.bf16.msra.mxu0 0
    %489 = vmatprep.subr.bf16.mxu0 0
    %490 = vmatpush1.bf16.msra.mxu0 0
    %491 = vmatprep.subr.bf16.mxu0 0
    %492 = vmatpush1.bf16.msra.mxu0 0
    %493 = vmatprep.subr.bf16.mxu0 0
    %494 = vmatpush1.bf16.msra.mxu0 0
    %495 = vmatprep.subr.bf16.mxu0 0
    %496 = vmatpush1.bf16.msra.mxu0 0
    %497 = vmatprep.subr.bf16.mxu0 0
    %498 = vmatpush1.bf16.msra.mxu0 0
    %499 = vmatprep.subr.bf16.mxu0 0
    %500 = vmatpush1.bf16.msra.mxu0 0
    %501 = vmatprep.subr.bf16.mxu0 0
    %502 = vmatpush1.bf16.msra.mxu0 0
    %503 = vmatprep.subr.bf16.mxu0 0
    %504 = vmatpush1.bf16.msra.mxu0 0
    %505 = vmatprep.subr.bf16.mxu0 0
    %506 = vmatpush1.bf16.msra.mxu0 0
    %507 = vmatprep.subr.bf16.mxu0 0
    %508 = vmatpush1.bf16.msra.mxu0 0
    %509 = vmatprep.subr.bf16.mxu0 0
    %510 = vmatpush1.bf16.msra.mxu0 0
    %511 = vmatprep.subr.bf16.mxu0 0
    %512 = vmatpush1.bf16.msra.mxu0 0
    %513 = vmatprep.subr.bf16.mxu0 0
    %514 = vmatpush1.bf16.msra.mxu0 0
    %515 = vmatprep.mubr.bf16.mxu0 0
    %516 = vmatmul.mubr.bf16.gmra.mrb[0].mxu0 %v475
    %v517 = vpop.f32.mrb[0].mxu0
    %v518 = vadd.f32 %v462, %v517
    %v519 = vpop.f32.mrb[0].mxu0
    %v520 = vpop.f32.mrb[0].mxu0
    %v521 = vpop.f32.mrb[0].mxu0
    %522 = vdwg.mxu0
    %v523 = vmax.f32 %v518, 0.0
    %v524 = vld [vmem:[#allocation6 + $0x58] sm:$0xf]
    %v525 = vld [vmem:[#allocation6 + $0x5c] sm:$0x1]
    %v526 = vld [vmem:[%s6 + $0x3] sm:$0x1]
    %v527 = vpack.c.bf16 %v523, %v523
    %v529 = vlaneseq
    %v530 = vshrl.u32 %v529, 7
    %v531 = vsub.s32 0, %v530
    %v532 = vrot.slane %v526, %v531
    %v536 = vunpack.c.l.b16 %v524
    %v537 = vunpack.c.l.b16 %v525
    %v538 = vpack.c.b16 %v537, %v536
    %vm539 = vcmask 80896
    %v541 = vsel %vm539, %v527, 0
    %v544 = vsel %vm405, %v538, 0
    %546 = vmatprep.subr.bf16.mxu0 0
    %547 = vmatpush1.bf16.msra.mxu0 %v544
    %548 = vmatprep.subr.bf16.mxu0 0
    %549 = vmatpush1.bf16.msra.mxu0 0
    %550 = vmatprep.subr.bf16.mxu0 0
    %551 = vmatpush1.bf16.msra.mxu0 0
    %552 = vmatprep.subr.bf16.mxu0 0
    %553 = vmatpush1.bf16.msra.mxu0 0
    %554 = vmatprep.subr.bf16.mxu0 0
    %555 = vmatpush1.bf16.msra.mxu0 0
    %556 = vmatprep.subr.bf16.mxu0 0
    %557 = vmatpush1.bf16.msra.mxu0 0
    %558 = vmatprep.subr.bf16.mxu0 0
    %559 = vmatpush1.bf16.msra.mxu0 0
    %560 = vmatprep.subr.bf16.mxu0 0
    %561 = vmatpush1.bf16.msra.mxu0 0
    %562 = vmatprep.subr.bf16.mxu0 0
    %563 = vmatpush1.bf16.msra.mxu0 0
    %564 = vmatprep.subr.bf16.mxu0 0
    %565 = vmatpush1.bf16.msra.mxu0 0
    %566 = vmatprep.subr.bf16.mxu0 0
    %567 = vmatpush1.bf16.msra.mxu0 0
    %568 = vmatprep.subr.bf16.mxu0 0
    %569 = vmatpush1.bf16.msra.mxu0 0
    %570 = vmatprep.subr.bf16.mxu0 0
    %571 = vmatpush1.bf16.msra.mxu0 0
    %572 = vmatprep.subr.bf16.mxu0 0
    %573 = vmatpush1.bf16.msra.mxu0 0
    %574 = vmatprep.subr.bf16.mxu0 0
    %575 = vmatpush1.bf16.msra.mxu0 0
    %576 = vmatprep.subr.bf16.mxu0 0
    %577 = vmatpush1.bf16.msra.mxu0 0
    %578 = vmatprep.mubr.bf16.mxu0 0
    %579 = vmatmul.mubr.bf16.gmra.mrb[0].mxu0 %v541
    %v580 = vpop.f32.mrb[0].mxu0
    %v581 = vadd.f32 %v532, %v580
    %v582 = vpop.f32.mrb[0].mxu0
    %v583 = vpop.f32.mrb[0].mxu0
    %v584 = vpop.f32.mrb[0].mxu0
    %585 = vdwg.mxu0
    %v586 = vmax.f32 %v581, 0.0
    %v587 = vld [vmem:[#allocation6 + $0x60] sm:$0xf]
    %v588 = vld [vmem:[#allocation6 + $0x64] sm:$0xf]
    %v589 = vld [vmem:[#allocation6 + $0x68] sm:$0x3]
    %v590 = vld [vmem:[%s6 + $0x4] sm:$0x1]
    %v591 = vpack.c.bf16 %v586, %v586
    %v593 = vlaneseq
    %v594 = vshrl.u32 %v593, 7
    %v595 = vsub.s32 0, %v594
    %v596 = vrot.slane %v590, %v595
    %v601 = vunpack.c.l.b16 %v587
    %v602 = vunpack.c.l.b16 %v588
    %v603 = vunpack.c.l.b16 %v589
    %v604 = vpack.c.b16 %v602, %v601
    %v605 = vpack.c.b16 %v603, %v603
    %vm607 = vcmask 162816
    %v609 = vsel %vm607, %v591, 0
    %v612 = vsel %vm477, %v605, 0
    %614 = vmatprep.subr.bf16.mxu0 0
    %615 = vmatpush1.bf16.msra.mxu0 %v604
    %616 = vmatprep.subr.bf16.mxu0 0
    %617 = vmatpush1.bf16.msra.mxu0 %v612
    %618 = vmatprep.subr.bf16.mxu0 0
    %619 = vmatpush1.bf16.msra.mxu0 0
    %620 = vmatprep.subr.bf16.mxu0 0
    %621 = vmatpush1.bf16.msra.mxu0 0
    %622 = vmatprep.subr.bf16.mxu0 0
    %623 = vmatpush1.bf16.msra.mxu0 0
    %624 = vmatprep.subr.bf16.mxu0 0
    %625 = vmatpush1.bf16.msra.mxu0 0
    %626 = vmatprep.subr.bf16.mxu0 0
    %627 = vmatpush1.bf16.msra.mxu0 0
    %628 = vmatprep.subr.bf16.mxu0 0
    %629 = vmatpush1.bf16.msra.mxu0 0
    %630 = vmatprep.subr.bf16.mxu0 0
    %631 = vmatpush1.bf16.msra.mxu0 0
    %632 = vmatprep.subr.bf16.mxu0 0
    %633 = vmatpush1.bf16.msra.mxu0 0
    %634 = vmatprep.subr.bf16.mxu0 0
    %635 = vmatpush1.bf16.msra.mxu0 0
    %636 = vmatprep.subr.bf16.mxu0 0
    %637 = vmatpush1.bf16.msra.mxu0 0
    %638 = vmatprep.subr.bf16.mxu0 0
    %639 = vmatpush1.bf16.msra.mxu0 0
    %640 = vmatprep.subr.bf16.mxu0 0
    %641 = vmatpush1.bf16.msra.mxu0 0
    %642 = vmatprep.subr.bf16.mxu0 0
    %643 = vmatpush1.bf16.msra.mxu0 0
    %644 = vmatprep.subr.bf16.mxu0 0
    %645 = vmatpush1.bf16.msra.mxu0 0
    %646 = vmatprep.mubr.bf16.mxu0 0
    %647 = vmatmul.mubr.bf16.gmra.mrb[0].mxu0 %v609
    %v648 = vpop.f32.mrb[0].mxu0
    %v649 = vadd.f32 %v596, %v648
    %v650 = vpop.f32.mrb[0].mxu0
    %v651 = vpop.f32.mrb[0].mxu0
    %v652 = vpop.f32.mrb[0].mxu0
    %653 = vdwg.mxu0
    %v654 = vmax.f32 %v649, 0.0
    %v655 = vld [vmem:[#allocation6 + $0x70] sm:$0xf]
    %v656 = vld [vmem:[#allocation6 + $0x74] sm:$0xf]
    %v657 = vld [vmem:[#allocation6 + $0x78] sm:$0xf]
    %v658 = vld [vmem:[#allocation6 + $0x7c] sm:$0xf]
    %v659 = vld [vmem:[#allocation6 + $0x80] sm:$0xf]
    %v660 = vld [vmem:[%s6 + $0x5] sm:$0x1]
    %v661 = vpack.c.bf16 %v654, %v654
    %v663 = vlaneseq
    %v664 = vshrl.u32 %v663, 7
    %v665 = vsub.s32 0, %v664
    %v666 = vrot.slane %v660, %v665
    %v673 = vunpack.c.l.b16 %v655
    %v674 = vunpack.c.l.b16 %v656
    %v675 = vunpack.c.l.b16 %v657
    %v676 = vunpack.c.l.b16 %v658
    %v677 = vunpack.c.l.b16 %v659
    %v678 = vpack.c.b16 %v674, %v673
    %v679 = vpack.c.b16 %v676, %v675
    %v680 = vpack.c.b16 %v677, %v677
    %vm683 = vcmask 326656
    %v685 = vsel %vm683, %v661, 0
    %vm687 = vcmask 1043456
    %v689 = vsel %vm687, %v680, 0
    %691 = vmatprep.subr.bf16.mxu0 0
    %692 = vmatpush1.bf16.msra.mxu0 %v678
    %693 = vmatprep.subr.bf16.mxu0 0
    %694 = vmatpush1.bf16.msra.mxu0 %v679
    %695 = vmatprep.subr.bf16.mxu0 0
    %696 = vmatpush1.bf16.msra.mxu0 %v689
    %697 = vmatprep.subr.bf16.mxu0 0
    %698 = vmatpush1.bf16.msra.mxu0 0
    %699 = vmatprep.subr.bf16.mxu0 0
    %700 = vmatpush1.bf16.msra.mxu0 0
    %701 = vmatprep.subr.bf16.mxu0 0
    %702 = vmatpush1.bf16.msra.mxu0 0
    %703 = vmatprep.subr.bf16.mxu0 0
    %704 = vmatpush1.bf16.msra.mxu0 0
    %705 = vmatprep.subr.bf16.mxu0 0
    %706 = vmatpush1.bf16.msra.mxu0 0
    %707 = vmatprep.subr.bf16.mxu0 0
    %708 = vmatpush1.bf16.msra.mxu0 0
    %709 = vmatprep.subr.bf16.mxu0 0
    %710 = vmatpush1.bf16.msra.mxu0 0
    %711 = vmatprep.subr.bf16.mxu0 0
    %712 = vmatpush1.bf16.msra.mxu0 0
    %713 = vmatprep.subr.bf16.mxu0 0
    %714 = vmatpush1.bf16.msra.mxu0 0
    %715 = vmatprep.subr.bf16.mxu0 0
    %716 = vmatpush1.bf16.msra.mxu0 0
    %717 = vmatprep.subr.bf16.mxu0 0
    %718 = vmatpush1.bf16.msra.mxu0 0
    %719 = vmatprep.subr.bf16.mxu0 0
    %720 = vmatpush1.bf16.msra.mxu0 0
    %721 = vmatprep.subr.bf16.mxu0 0
    %722 = vmatpush1.bf16.msra.mxu0 0
    %723 = vmatprep.mubr.bf16.mxu0 0
    %724 = vmatmul.mubr.bf16.gmra.mrb[0].mxu0 %v685
    %v725 = vpop.f32.mrb[0].mxu0
    %v726 = vadd.f32 %v666, %v725
    %v727 = vpop.f32.mrb[0].mxu0
    %v728 = vpop.f32.mrb[0].mxu0
    %v729 = vpop.f32.mrb[0].mxu0
    %730 = vdwg.mxu0
    %v731 = vmax.f32 %v726, 0.0
    %v732 = vld [vmem:[%s6 + $0x6] sm:$0xff]
    %v733 = vld [vmem:[%s6 + $0xe] sm:$0x7]
    %v734 = vpack.c.bf16 %v731, %v731
    %v735 = vld [vmem:[#allocation7] sm:$0xff]
    %v736 = vld [vmem:[#allocation7 + $0x8] sm:$0xff]
    %v737 = vld [vmem:[#allocation7 + $0x10] sm:$0xff]
    %v738 = vld [vmem:[#allocation7 + $0x18] sm:$0xff]
    %v739 = vld [vmem:[#allocation7 + $0x20] sm:$0xff]
    %v740 = vld [vmem:[#allocation7 + $0x28] sm:$0xf]
    %v741 = vld [vmem:[#allocation7 + $0x2c] sm:$0xff]
    %v742 = vld [vmem:[#allocation7 + $0x34] sm:$0xff]
    %v743 = vld [vmem:[#allocation7 + $0x3c] sm:$0xff]
    %v744 = vld [vmem:[#allocation7 + $0x44] sm:$0xff]
    %v745 = vld [vmem:[#allocation7 + $0x4c] sm:$0xff]
    %v746 = vld [vmem:[#allocation7 + $0x54] sm:$0xf]
    %v747 = vld [vmem:[#allocation7 + $0x58] sm:$0xff]
    %v748 = vld [vmem:[#allocation7 + $0x60] sm:$0xff]
    %v749 = vld [vmem:[#allocation7 + $0x68] sm:$0xff]
    %v750 = vld [vmem:[#allocation7 + $0x70] sm:$0xff]
    %v751 = vld [vmem:[#allocation7 + $0x78] sm:$0xff]
    %v752 = vld [vmem:[#allocation7 + $0x80] sm:$0xf]
    %v753 = vld [vmem:[#allocation7 + $0x84] sm:$0xff]
    %v754 = vld [vmem:[#allocation7 + $0x8c] sm:$0xff]
    %v755 = vld [vmem:[#allocation7 + $0x94] sm:$0xff]
    %v756 = vld [vmem:[#allocation7 + $0x9c] sm:$0xff]
    %v757 = vld [vmem:[#allocation7 + $0xa4] sm:$0xff]
    %v758 = vld [vmem:[#allocation7 + $0xac] sm:$0xf]
    %v759 = vld [vmem:[#allocation7 + $0xb0] sm:$0xff]
    %v760 = vld [vmem:[#allocation7 + $0xb8] sm:$0xff]
    %v761 = vld [vmem:[#allocation7 + $0xc0] sm:$0xff]
    %v762 = vld [vmem:[#allocation7 + $0xc8] sm:$0xff]
    %v763 = vld [vmem:[#allocation7 + $0xd0] sm:$0xff]
    %v764 = vld [vmem:[#allocation7 + $0xd8] sm:$0xf]
    %v765 = vld [vmem:[#allocation7 + $0xdc] sm:$0xff]
    %v766 = vld [vmem:[#allocation7 + $0xe4] sm:$0xff]
    %v767 = vld [vmem:[#allocation7 + $0xec] sm:$0xff]
    %v768 = vld [vmem:[#allocation7 + $0xf4] sm:$0xff]
    %v769 = vld [vmem:[#allocation7 + $0xfc] sm:$0xff]
    %v770 = vld [vmem:[#allocation7 + $0x104] sm:$0xf]
    %v771 = vld [vmem:[#allocation7 + $0x108] sm:$0xff]
    %v772 = vld [vmem:[#allocation7 + $0x110] sm:$0xff]
    %v773 = vld [vmem:[#allocation7 + $0x118] sm:$0xff]
    %v774 = vld [vmem:[#allocation7 + $0x120] sm:$0xff]
    %v775 = vld [vmem:[#allocation7 + $0x128] sm:$0xff]
    %v776 = vld [vmem:[#allocation7 + $0x130] sm:$0xf]
    %v777 = vld [vmem:[#allocation7 + $0x134] sm:$0xff]
    %v778 = vld [vmem:[#allocation7 + $0x13c] sm:$0xff]
    %v779 = vld [vmem:[#allocation7 + $0x144] sm:$0xff]
    %v780 = vld [vmem:[#allocation7 + $0x14c] sm:$0xff]
    %v781 = vld [vmem:[#allocation7 + $0x154] sm:$0xff]
    %v782 = vld [vmem:[#allocation7 + $0x15c] sm:$0xf]
    %v783 = vld [vmem:[#allocation7 + $0x160] sm:$0xff]
    %v784 = vld [vmem:[#allocation7 + $0x168] sm:$0xff]
    %v785 = vld [vmem:[#allocation7 + $0x170] sm:$0xff]
    %v786 = vld [vmem:[#allocation7 + $0x178] sm:$0xff]
    %v787 = vld [vmem:[#allocation7 + $0x180] sm:$0xff]
    %v788 = vld [vmem:[#allocation7 + $0x188] sm:$0xf]
    %v789 = vld [vmem:[#allocation7 + $0x18c] sm:$0xff]
    %v790 = vld [vmem:[#allocation7 + $0x194] sm:$0xff]
    %v791 = vld [vmem:[#allocation7 + $0x19c] sm:$0xff]
    %v792 = vld [vmem:[#allocation7 + $0x1a4] sm:$0xff]
    %v793 = vld [vmem:[#allocation7 + $0x1ac] sm:$0xff]
    %v794 = vld [vmem:[#allocation7 + $0x1b4] sm:$0xf]
    %v797 = vlaneseq
    %v798 = vshrl.u32 %v797, 7
    %v799 = vsub.s32 0, %v798
    %v800 = vrot.slane %v732, %v799
    %v801 = vlaneseq
    %v802 = vshrl.u32 %v801, 7
    %v803 = vsub.s32 1, %v802
    %v804 = vrot.slane %v732, %v803
    %v805 = vlaneseq
    %v806 = vshrl.u32 %v805, 7
    %v807 = vsub.s32 2, %v806
    %v808 = vrot.slane %v732, %v807
    %v809 = vlaneseq
    %v810 = vshrl.u32 %v809, 7
    %v811 = vsub.s32 3, %v810
    %v812 = vrot.slane %v732, %v811
    %v813 = vlaneseq
    %v814 = vshrl.u32 %v813, 7
    %v815 = vsub.s32 4, %v814
    %v816 = vrot.slane %v732, %v815
    %v817 = vlaneseq
    %v818 = vshrl.u32 %v817, 7
    %v819 = vsub.s32 5, %v818
    %v820 = vrot.slane %v732, %v819
    %v821 = vlaneseq
    %v822 = vshrl.u32 %v821, 7
    %v823 = vsub.s32 6, %v822
    %v824 = vrot.slane %v732, %v823
    %v825 = vlaneseq
    %v826 = vshrl.u32 %v825, 7
    %v827 = vsub.s32 7, %v826
    %v828 = vrot.slane %v732, %v827
    %v829 = vlaneseq
    %v830 = vshrl.u32 %v829, 7
    %v831 = vsub.s32 0, %v830
    %v832 = vrot.slane %v733, %v831
    %v833 = vlaneseq
    %v834 = vshrl.u32 %v833, 7
    %v835 = vsub.s32 1, %v834
    %v836 = vrot.slane %v733, %v835
    %v837 = vlaneseq
    %v838 = vshrl.u32 %v837, 7
    %v839 = vsub.s32 2, %v838
    %v840 = vrot.slane %v733, %v839
    %v912 = vunpack.c.l.b16 %v735
    %v913 = vunpack.c.h.b16 %v735
    %v914 = vunpack.c.l.b16 %v736
    %v915 = vunpack.c.h.b16 %v736
    %v916 = vunpack.c.l.b16 %v737
    %v917 = vunpack.c.h.b16 %v737
    %v918 = vunpack.c.l.b16 %v738
    %v919 = vunpack.c.h.b16 %v738
    %v920 = vunpack.c.l.b16 %v739
    %v921 = vunpack.c.h.b16 %v739
    %v922 = vunpack.c.l.b16 %v740
    %v923 = vunpack.c.l.b16 %v741
    %v924 = vunpack.c.h.b16 %v741
    %v925 = vunpack.c.l.b16 %v742
    %v926 = vunpack.c.h.b16 %v742
    %v927 = vunpack.c.l.b16 %v743
    %v928 = vunpack.c.h.b16 %v743
    %v929 = vunpack.c.l.b16 %v744
    %v930 = vunpack.c.h.b16 %v744
    %v931 = vunpack.c.l.b16 %v745
    %v932 = vunpack.c.h.b16 %v745
    %v933 = vunpack.c.l.b16 %v746
    %v934 = vunpack.c.l.b16 %v747
    %v935 = vunpack.c.h.b16 %v747
    %v936 = vunpack.c.l.b16 %v748
    %v937 = vunpack.c.h.b16 %v748
    %v938 = vunpack.c.l.b16 %v749
    %v939 = vunpack.c.h.b16 %v749
    %v940 = vunpack.c.l.b16 %v750
    %v941 = vunpack.c.h.b16 %v750
    %v942 = vunpack.c.l.b16 %v751
    %v943 = vunpack.c.h.b16 %v751
    %v944 = vunpack.c.l.b16 %v752
    %v945 = vunpack.c.l.b16 %v753
    %v946 = vunpack.c.h.b16 %v753
    %v947 = vunpack.c.l.b16 %v754
    %v948 = vunpack.c.h.b16 %v754
    %v949 = vunpack.c.l.b16 %v755
    %v950 = vunpack.c.h.b16 %v755
    %v951 = vunpack.c.l.b16 %v756
    %v952 = vunpack.c.h.b16 %v756
    %v953 = vunpack.c.l.b16 %v757
    %v954 = vunpack.c.h.b16 %v757
    %v955 = vunpack.c.l.b16 %v758
    %v956 = vunpack.c.l.b16 %v759
    %v957 = vunpack.c.h.b16 %v759
    %v958 = vunpack.c.l.b16 %v760
    %v959 = vunpack.c.h.b16 %v760
    %v960 = vunpack.c.l.b16 %v761
    %v961 = vunpack.c.h.b16 %v761
    %v962 = vunpack.c.l.b16 %v762
    %v963 = vunpack.c.h.b16 %v762
    %v964 = vunpack.c.l.b16 %v763
    %v965 = vunpack.c.h.b16 %v763
    %v966 = vunpack.c.l.b16 %v764
    %v967 = vunpack.c.l.b16 %v765
    %v968 = vunpack.c.h.b16 %v765
    %v969 = vunpack.c.l.b16 %v766
    %v970 = vunpack.c.h.b16 %v766
    %v971 = vunpack.c.l.b16 %v767
    %v972 = vunpack.c.h.b16 %v767
    %v973 = vunpack.c.l.b16 %v768
    %v974 = vunpack.c.h.b16 %v768
    %v975 = vunpack.c.l.b16 %v769
    %v976 = vunpack.c.h.b16 %v769
    %v977 = vunpack.c.l.b16 %v770
    %v978 = vunpack.c.l.b16 %v771
    %v979 = vunpack.c.h.b16 %v771
    %v980 = vunpack.c.l.b16 %v772
    %v981 = vunpack.c.h.b16 %v772
    %v982 = vunpack.c.l.b16 %v773
    %v983 = vunpack.c.h.b16 %v773
    %v984 = vunpack.c.l.b16 %v774
    %v985 = vunpack.c.h.b16 %v774
    %v986 = vunpack.c.l.b16 %v775
    %v987 = vunpack.c.h.b16 %v775
    %v988 = vunpack.c.l.b16 %v776
    %v989 = vunpack.c.l.b16 %v777
    %v990 = vunpack.c.h.b16 %v777
    %v991 = vunpack.c.l.b16 %v778
    %v992 = vunpack.c.h.b16 %v778
    %v993 = vunpack.c.l.b16 %v779
    %v994 = vunpack.c.h.b16 %v779
    %v995 = vunpack.c.l.b16 %v780
    %v996 = vunpack.c.h.b16 %v780
    %v997 = vunpack.c.l.b16 %v781
    %v998 = vunpack.c.h.b16 %v781
    %v999 = vunpack.c.l.b16 %v782
    %v1000 = vunpack.c.l.b16 %v783
    %v1001 = vunpack.c.h.b16 %v783
    %v1002 = vunpack.c.l.b16 %v784
    %v1003 = vunpack.c.h.b16 %v784
    %v1004 = vunpack.c.l.b16 %v785
    %v1005 = vunpack.c.h.b16 %v785
    %v1006 = vunpack.c.l.b16 %v786
    %v1007 = vunpack.c.h.b16 %v786
    %v1008 = vunpack.c.l.b16 %v787
    %v1009 = vunpack.c.h.b16 %v787
    %v1010 = vunpack.c.l.b16 %v788
    %v1011 = vunpack.c.l.b16 %v789
    %v1012 = vunpack.c.h.b16 %v789
    %v1013 = vunpack.c.l.b16 %v790
    %v1014 = vunpack.c.h.b16 %v790
    %v1015 = vunpack.c.l.b16 %v791
    %v1016 = vunpack.c.h.b16 %v791
    %v1017 = vunpack.c.l.b16 %v792
    %v1018 = vunpack.c.h.b16 %v792
    %v1019 = vunpack.c.l.b16 %v793
    %v1020 = vunpack.c.h.b16 %v793
    %v1021 = vunpack.c.l.b16 %v794
    %v1022 = vpack.c.b16 %v923, %v912
    %v1023 = vpack.c.b16 %v924, %v913
    %v1024 = vpack.c.b16 %v925, %v914
    %v1025 = vpack.c.b16 %v926, %v915
    %v1026 = vpack.c.b16 %v927, %v916
    %v1027 = vpack.c.b16 %v928, %v917
    %v1028 = vpack.c.b16 %v929, %v918
    %v1029 = vpack.c.b16 %v930, %v919
    %v1030 = vpack.c.b16 %v931, %v920
    %v1031 = vpack.c.b16 %v932, %v921
    %v1032 = vpack.c.b16 %v933, %v922
    %v1033 = vpack.c.b16 %v945, %v934
    %v1034 = vpack.c.b16 %v946, %v935
    %v1035 = vpack.c.b16 %v947, %v936
    %v1036 = vpack.c.b16 %v948, %v937
    %v1037 = vpack.c.b16 %v949, %v938
    %v1038 = vpack.c.b16 %v950, %v939
    %v1039 = vpack.c.b16 %v951, %v940
    %v1040 = vpack.c.b16 %v952, %v941
    %v1041 = vpack.c.b16 %v953, %v942
    %v1042 = vpack.c.b16 %v954, %v943
    %v1043 = vpack.c.b16 %v955, %v944
    %v1044 = vpack.c.b16 %v967, %v956
    %v1045 = vpack.c.b16 %v968, %v957
    %v1046 = vpack.c.b16 %v969, %v958
    %v1047 = vpack.c.b16 %v970, %v959
    %v1048 = vpack.c.b16 %v971, %v960
    %v1049 = vpack.c.b16 %v972, %v961
    %v1050 = vpack.c.b16 %v973, %v962
    %v1051 = vpack.c.b16 %v974, %v963
    %v1052 = vpack.c.b16 %v975, %v964
    %v1053 = vpack.c.b16 %v976, %v965
    %v1054 = vpack.c.b16 %v977, %v966
    %v1055 = vpack.c.b16 %v989, %v978
    %v1056 = vpack.c.b16 %v990, %v979
    %v1057 = vpack.c.b16 %v991, %v980
    %v1058 = vpack.c.b16 %v992, %v981
    %v1059 = vpack.c.b16 %v993, %v982
    %v1060 = vpack.c.b16 %v994, %v983
    %v1061 = vpack.c.b16 %v995, %v984
    %v1062 = vpack.c.b16 %v996, %v985
    %v1063 = vpack.c.b16 %v997, %v986
    %v1064 = vpack.c.b16 %v998, %v987
    %v1065 = vpack.c.b16 %v999, %v988
    %v1066 = vpack.c.b16 %v1011, %v1000
    %v1067 = vpack.c.b16 %v1012, %v1001
    %v1068 = vpack.c.b16 %v1013, %v1002
    %v1069 = vpack.c.b16 %v1014, %v1003
    %v1070 = vpack.c.b16 %v1015, %v1004
    %v1071 = vpack.c.b16 %v1016, %v1005
    %v1072 = vpack.c.b16 %v1017, %v1006
    %v1073 = vpack.c.b16 %v1018, %v1007
    %v1074 = vpack.c.b16 %v1019, %v1008
    %v1075 = vpack.c.b16 %v1020, %v1009
    %v1076 = vpack.c.b16 %v1021, %v1010
    %vm1132 = vcmask 654336
    %v1134 = vsel %vm1132, %v734, 0
    %1136 = vmatprep.subr.bf16.mxu0 %v1023
    %1137 = vmatpush1.bf16.msra.mxu0 %v1022
    %1138 = vmatprep.subr.bf16.mxu0 %v1034
    %1139 = vmatpush1.bf16.msra.mxu0 %v1033
    %1140 = vmatprep.subr.bf16.mxu0 %v1045
    %1141 = vmatpush1.bf16.msra.mxu0 %v1044
    %1142 = vmatprep.subr.bf16.mxu0 %v1056
    %1143 = vmatpush1.bf16.msra.mxu0 %v1055
    %1144 = vmatprep.subr.bf16.mxu0 %v1067
    %1145 = vmatpush1.bf16.msra.mxu0 %v1066
    %1146 = vmatprep.subr.bf16.mxu0 0
    %1147 = vmatpush1.bf16.msra.mxu0 0
    %1148 = vmatprep.subr.bf16.mxu0 0
    %1149 = vmatpush1.bf16.msra.mxu0 0
    %1150 = vmatprep.subr.bf16.mxu0 0
    %1151 = vmatpush1.bf16.msra.mxu0 0
    %1152 = vmatprep.subr.bf16.mxu0 0
    %1153 = vmatpush1.bf16.msra.mxu0 0
    %1154 = vmatprep.subr.bf16.mxu0 0
    %1155 = vmatpush1.bf16.msra.mxu0 0
    %1156 = vmatprep.subr.bf16.mxu0 0
    %1157 = vmatpush1.bf16.msra.mxu0 0
    %1158 = vmatprep.subr.bf16.mxu0 0
    %1159 = vmatpush1.bf16.msra.mxu0 0
    %1160 = vmatprep.subr.bf16.mxu0 0
    %1161 = vmatpush1.bf16.msra.mxu0 0
    %1162 = vmatprep.subr.bf16.mxu0 0
    %1163 = vmatpush1.bf16.msra.mxu0 0
    %1164 = vmatprep.subr.bf16.mxu0 0
    %1165 = vmatpush1.bf16.msra.mxu0 0
    %1166 = vmatprep.subr.bf16.mxu0 0
    %1167 = vmatpush1.bf16.msra.mxu0 0
    %1168 = vmatprep.mubr.bf16.mxu0 0
    %1169 = vmatmul.mubr.bf16.gmra.mrb[0].mxu0 %v1134
    %v1170 = vpop.f32.mrb[0].mxu0
    %v1171 = vadd.f32 %v800, %v1170
    %v1172 = vpop.f32.mrb[0].mxu0
    %v1173 = vadd.f32 %v804, %v1172
    %v1174 = vpop.f32.mrb[0].mxu0
    %v1175 = vpop.f32.mrb[0].mxu0
    %1176 = vdwg.mxu0
    %1177 = vmatprep.subr.bf16.mxu0 %v1025
    %1178 = vmatpush1.bf16.msra.mxu0 %v1024
    %1179 = vmatprep.subr.bf16.mxu0 %v1036
    %1180 = vmatpush1.bf16.msra.mxu0 %v1035
    %1181 = vmatprep.subr.bf16.mxu0 %v1047
    %1182 = vmatpush1.bf16.msra.mxu0 %v1046
    %1183 = vmatprep.subr.bf16.mxu0 %v1058
    %1184 = vmatpush1.bf16.msra.mxu0 %v1057
    %1185 = vmatprep.subr.bf16.mxu0 %v1069
    %1186 = vmatpush1.bf16.msra.mxu0 %v1068
    %1187 = vmatprep.subr.bf16.mxu0 0
    %1188 = vmatpush1.bf16.msra.mxu0 0
    %1189 = vmatprep.subr.bf16.mxu0 0
    %1190 = vmatpush1.bf16.msra.mxu0 0
    %1191 = vmatprep.subr.bf16.mxu0 0
    %1192 = vmatpush1.bf16.msra.mxu0 0
    %1193 = vmatprep.subr.bf16.mxu0 0
    %1194 = vmatpush1.bf16.msra.mxu0 0
    %1195 = vmatprep.subr.bf16.mxu0 0
    %1196 = vmatpush1.bf16.msra.mxu0 0
    %1197 = vmatprep.subr.bf16.mxu0 0
    %1198 = vmatpush1.bf16.msra.mxu0 0
    %1199 = vmatprep.subr.bf16.mxu0 0
    %1200 = vmatpush1.bf16.msra.mxu0 0
    %1201 = vmatprep.subr.bf16.mxu0 0
    %1202 = vmatpush1.bf16.msra.mxu0 0
    %1203 = vmatprep.subr.bf16.mxu0 0
    %1204 = vmatpush1.bf16.msra.mxu0 0
    %1205 = vmatprep.subr.bf16.mxu0 0
    %1206 = vmatpush1.bf16.msra.mxu0 0
    %1207 = vmatprep.subr.bf16.mxu0 0
    %1208 = vmatpush1.bf16.msra.mxu0 0
    %1209 = vmatprep.mubr.bf16.mxu0 0
    %1210 = vmatmul.mubr.bf16.gmra.mrb[0].mxu0 %v1134
    %v1211 = vpop.f32.mrb[0].mxu0
    %v1212 = vadd.f32 %v808, %v1211
    %v1213 = vpop.f32.mrb[0].mxu0
    %v1214 = vadd.f32 %v812, %v1213
    %v1215 = vpop.f32.mrb[0].mxu0
    %v1216 = vpop.f32.mrb[0].mxu0
    %1217 = vdwg.mxu0
    %1218 = vmatprep.subr.bf16.mxu0 %v1027
    %1219 = vmatpush1.bf16.msra.mxu0 %v1026
    %1220 = vmatprep.subr.bf16.mxu0 %v1038
    %1221 = vmatpush1.bf16.msra.mxu0 %v1037
    %1222 = vmatprep.subr.bf16.mxu0 %v1049
    %1223 = vmatpush1.bf16.msra.mxu0 %v1048
    %1224 = vmatprep.subr.bf16.mxu0 %v1060
    %1225 = vmatpush1.bf16.msra.mxu0 %v1059
    %1226 = vmatprep.subr.bf16.mxu0 %v1071
    %1227 = vmatpush1.bf16.msra.mxu0 %v1070
    %1228 = vmatprep.subr.bf16.mxu0 0
    %1229 = vmatpush1.bf16.msra.mxu0 0
    %1230 = vmatprep.subr.bf16.mxu0 0
    %1231 = vmatpush1.bf16.msra.mxu0 0
    %1232 = vmatprep.subr.bf16.mxu0 0
    %1233 = vmatpush1.bf16.msra.mxu0 0
    %1234 = vmatprep.subr.bf16.mxu0 0
    %1235 = vmatpush1.bf16.msra.mxu0 0
    %1236 = vmatprep.subr.bf16.mxu0 0
    %1237 = vmatpush1.bf16.msra.mxu0 0
    %1238 = vmatprep.subr.bf16.mxu0 0
    %1239 = vmatpush1.bf16.msra.mxu0 0
    %1240 = vmatprep.subr.bf16.mxu0 0
    %1241 = vmatpush1.bf16.msra.mxu0 0
    %1242 = vmatprep.subr.bf16.mxu0 0
    %1243 = vmatpush1.bf16.msra.mxu0 0
    %1244 = vmatprep.subr.bf16.mxu0 0
    %1245 = vmatpush1.bf16.msra.mxu0 0
    %1246 = vmatprep.subr.bf16.mxu0 0
    %1247 = vmatpush1.bf16.msra.mxu0 0
    %1248 = vmatprep.subr.bf16.mxu0 0
    %1249 = vmatpush1.bf16.msra.mxu0 0
    %1250 = vmatprep.mubr.bf16.mxu0 0
    %1251 = vmatmul.mubr.bf16.gmra.mrb[0].mxu0 %v1134
    %v1252 = vpop.f32.mrb[0].mxu0
    %v1253 = vadd.f32 %v816, %v1252
    %v1254 = vpop.f32.mrb[0].mxu0
    %v1255 = vadd.f32 %v820, %v1254
    %v1256 = vpop.f32.mrb[0].mxu0
    %v1257 = vpop.f32.mrb[0].mxu0
    %1258 = vdwg.mxu0
    %1259 = vmatprep.subr.bf16.mxu0 %v1029
    %1260 = vmatpush1.bf16.msra.mxu0 %v1028
    %1261 = vmatprep.subr.bf16.mxu0 %v1040
    %1262 = vmatpush1.bf16.msra.mxu0 %v1039
    %1263 = vmatprep.subr.bf16.mxu0 %v1051
    %1264 = vmatpush1.bf16.msra.mxu0 %v1050
    %1265 = vmatprep.subr.bf16.mxu0 %v1062
    %1266 = vmatpush1.bf16.msra.mxu0 %v1061
    %1267 = vmatprep.subr.bf16.mxu0 %v1073
    %1268 = vmatpush1.bf16.msra.mxu0 %v1072
    %1269 = vmatprep.subr.bf16.mxu0 0
    %1270 = vmatpush1.bf16.msra.mxu0 0
    %1271 = vmatprep.subr.bf16.mxu0 0
    %1272 = vmatpush1.bf16.msra.mxu0 0
    %1273 = vmatprep.subr.bf16.mxu0 0
    %1274 = vmatpush1.bf16.msra.mxu0 0
    %1275 = vmatprep.subr.bf16.mxu0 0
    %1276 = vmatpush1.bf16.msra.mxu0 0
    %1277 = vmatprep.subr.bf16.mxu0 0
    %1278 = vmatpush1.bf16.msra.mxu0 0
    %1279 = vmatprep.subr.bf16.mxu0 0
    %1280 = vmatpush1.bf16.msra.mxu0 0
    %1281 = vmatprep.subr.bf16.mxu0 0
    %1282 = vmatpush1.bf16.msra.mxu0 0
    %1283 = vmatprep.subr.bf16.mxu0 0
    %1284 = vmatpush1.bf16.msra.mxu0 0
    %1285 = vmatprep.subr.bf16.mxu0 0
    %1286 = vmatpush1.bf16.msra.mxu0 0
    %1287 = vmatprep.subr.bf16.mxu0 0
    %1288 = vmatpush1.bf16.msra.mxu0 0
    %1289 = vmatprep.subr.bf16.mxu0 0
    %1290 = vmatpush1.bf16.msra.mxu0 0
    %1291 = vmatprep.mubr.bf16.mxu0 0
    %1292 = vmatmul.mubr.bf16.gmra.mrb[0].mxu0 %v1134
    %v1293 = vpop.f32.mrb[0].mxu0
    %v1294 = vadd.f32 %v824, %v1293
    %v1295 = vpop.f32.mrb[0].mxu0
    %v1296 = vadd.f32 %v828, %v1295
    %v1297 = vpop.f32.mrb[0].mxu0
    %v1298 = vpop.f32.mrb[0].mxu0
    %1299 = vdwg.mxu0
    %1300 = vmatprep.subr.bf16.mxu0 %v1031
    %1301 = vmatpush1.bf16.msra.mxu0 %v1030
    %1302 = vmatprep.subr.bf16.mxu0 %v1042
    %1303 = vmatpush1.bf16.msra.mxu0 %v1041
    %1304 = vmatprep.subr.bf16.mxu0 %v1053
    %1305 = vmatpush1.bf16.msra.mxu0 %v1052
    %1306 = vmatprep.subr.bf16.mxu0 %v1064
    %1307 = vmatpush1.bf16.msra.mxu0 %v1063
    %1308 = vmatprep.subr.bf16.mxu0 %v1075
    %1309 = vmatpush1.bf16.msra.mxu0 %v1074
    %1310 = vmatprep.subr.bf16.mxu0 0
    %1311 = vmatpush1.bf16.msra.mxu0 0
    %1312 = vmatprep.subr.bf16.mxu0 0
    %1313 = vmatpush1.bf16.msra.mxu0 0
    %1314 = vmatprep.subr.bf16.mxu0 0
    %1315 = vmatpush1.bf16.msra.mxu0 0
    %1316 = vmatprep.subr.bf16.mxu0 0
    %1317 = vmatpush1.bf16.msra.mxu0 0
    %1318 = vmatprep.subr.bf16.mxu0 0
    %1319 = vmatpush1.bf16.msra.mxu0 0
    %1320 = vmatprep.subr.bf16.mxu0 0
    %1321 = vmatpush1.bf16.msra.mxu0 0
    %1322 = vmatprep.subr.bf16.mxu0 0
    %1323 = vmatpush1.bf16.msra.mxu0 0
    %1324 = vmatprep.subr.bf16.mxu0 0
    %1325 = vmatpush1.bf16.msra.mxu0 0
    %1326 = vmatprep.subr.bf16.mxu0 0
    %1327 = vmatpush1.bf16.msra.mxu0 0
    %1328 = vmatprep.subr.bf16.mxu0 0
    %1329 = vmatpush1.bf16.msra.mxu0 0
    %1330 = vmatprep.subr.bf16.mxu0 0
    %1331 = vmatpush1.bf16.msra.mxu0 0
    %1332 = vmatprep.mubr.bf16.mxu0 0
    %1333 = vmatmul.mubr.bf16.gmra.mrb[0].mxu0 %v1134
    %v1334 = vpop.f32.mrb[0].mxu0
    %v1335 = vadd.f32 %v832, %v1334
    %v1336 = vpop.f32.mrb[0].mxu0
    %v1337 = vadd.f32 %v836, %v1336
    %v1338 = vpop.f32.mrb[0].mxu0
    %v1339 = vpop.f32.mrb[0].mxu0
    %1340 = vdwg.mxu0
    %1341 = vmatprep.subr.bf16.mxu0 0
    %1342 = vmatpush1.bf16.msra.mxu0 %v1032
    %1343 = vmatprep.subr.bf16.mxu0 0
    %1344 = vmatpush1.bf16.msra.mxu0 %v1043
    %1345 = vmatprep.subr.bf16.mxu0 0
    %1346 = vmatpush1.bf16.msra.mxu0 %v1054
    %1347 = vmatprep.subr.bf16.mxu0 0
    %1348 = vmatpush1.bf16.msra.mxu0 %v1065
    %1349 = vmatprep.subr.bf16.mxu0 0
    %1350 = vmatpush1.bf16.msra.mxu0 %v1076
    %1351 = vmatprep.subr.bf16.mxu0 0
    %1352 = vmatpush1.bf16.msra.mxu0 0
    %1353 = vmatprep.subr.bf16.mxu0 0
    %1354 = vmatpush1.bf16.msra.mxu0 0
    %1355 = vmatprep.subr.bf16.mxu0 0
    %1356 = vmatpush1.bf16.msra.mxu0 0
    %1357 = vmatprep.subr.bf16.mxu0 0
    %1358 = vmatpush1.bf16.msra.mxu0 0
    %1359 = vmatprep.subr.bf16.mxu0 0
    %1360 = vmatpush1.bf16.msra.mxu0 0
    %1361 = vmatprep.subr.bf16.mxu0 0
    %1362 = vmatpush1.bf16.msra.mxu0 0
    %1363 = vmatprep.subr.bf16.mxu0 0
    %1364 = vmatpush1.bf16.msra.mxu0 0
    %1365 = vmatprep.subr.bf16.mxu0 0
    %1366 = vmatpush1.bf16.msra.mxu0 0
    %1367 = vmatprep.subr.bf16.mxu0 0
    %1368 = vmatpush1.bf16.msra.mxu0 0
    %1369 = vmatprep.subr.bf16.mxu0 0
    %1370 = vmatpush1.bf16.msra.mxu0 0
    %1371 = vmatprep.subr.bf16.mxu0 0
    %1372 = vmatpush1.bf16.msra.mxu0 0
    %1373 = vmatprep.mubr.bf16.mxu0 0
    %1374 = vmatmul.mubr.bf16.gmra.mrb[0].mxu0 %v1134
    %v1375 = vpop.f32.mrb[0].mxu0
    %v1376 = vadd.f32 %v840, %v1375
    %v1377 = vpop.f32.mrb[0].mxu0
    %v1378 = vpop.f32.mrb[0].mxu0
    %v1379 = vpop.f32.mrb[0].mxu0
    %1380 = vdwg.mxu0
    %1381 = vst [vmem:[%s7] sm:$0xff] %v1171
    %1382 = vst [vmem:[%s7 + $0x8] sm:$0xff] %v1173
    %1383 = vst [vmem:[%s7 + $0x10] sm:$0xff] %v1212
    %1384 = vst [vmem:[%s7 + $0x18] sm:$0xff] %v1214
    %1385 = vst [vmem:[%s7 + $0x20] sm:$0xff] %v1253
    %1386 = vst [vmem:[%s7 + $0x28] sm:$0xff] %v1255
    %1387 = vst [vmem:[%s7 + $0x30] sm:$0xff] %v1294
    %1388 = vst [vmem:[%s7 + $0x38] sm:$0xff] %v1296
    %1389 = vst [vmem:[%s7 + $0x40] sm:$0xff] %v1335
    %1390 = vst [vmem:[%s7 + $0x48] sm:$0xff] %v1337
    %1391 = vst [vmem:[%s7 + $0x50] sm:$0xff] %v1376
    %v1392 = vsub.f32 0.0, %v1171
    %v1393 = vsub.f32 0.0, %v1173
    %v1394 = vsub.f32 0.0, %v1212
    %v1395 = vsub.f32 0.0, %v1214
    %v1396 = vsub.f32 0.0, %v1253
    %v1397 = vsub.f32 0.0, %v1255
    %v1398 = vsub.f32 0.0, %v1294
    %v1399 = vsub.f32 0.0, %v1296
    %v1400 = vsub.f32 0.0, %v1335
    %v1401 = vsub.f32 0.0, %v1337
    %v1402 = vsub.f32 0.0, %v1376
    %v1403 = vmul.f32 %v1392, 1.442695
    %v1404 = vpow.pop %v1403
    %v1405 = vmul.f32 %v1393, 1.442695
    %v1406 = vpow.pop %v1405
    %v1407 = vmul.f32 %v1394, 1.442695
    %v1408 = vpow.pop %v1407
    %v1409 = vmul.f32 %v1395, 1.442695
    %v1410 = vpow.pop %v1409
    %v1411 = vmul.f32 %v1396, 1.442695
    %v1412 = vpow.pop %v1411
    %v1413 = vmul.f32 %v1397, 1.442695
    %v1414 = vpow.pop %v1413
    %v1415 = vmul.f32 %v1398, 1.442695
    %v1416 = vpow.pop %v1415
    %v1417 = vmul.f32 %v1399, 1.442695
    %v1418 = vpow.pop %v1417
    %v1419 = vmul.f32 %v1400, 1.442695
    %v1420 = vpow.pop %v1419
    %v1421 = vmul.f32 %v1401, 1.442695
    %v1422 = vpow.pop %v1421
    %v1423 = vmul.f32 %v1402, 1.442695
    %v1424 = vpow.pop %v1423
    %v1425 = vadd.f32 %v1404, 1.0
    %v1426 = vadd.f32 %v1406, 1.0
    %v1427 = vadd.f32 %v1408, 1.0
    %v1428 = vadd.f32 %v1410, 1.0
    %v1429 = vadd.f32 %v1412, 1.0
    %v1430 = vadd.f32 %v1414, 1.0
    %v1431 = vadd.f32 %v1416, 1.0
    %v1432 = vadd.f32 %v1418, 1.0
    %v1433 = vadd.f32 %v1420, 1.0
    %v1434 = vadd.f32 %v1422, 1.0
    %v1435 = vadd.f32 %v1424, 1.0
    %v1436 = vrcp.pop %v1425
    %v1437 = vrcp.pop %v1426
    %v1438 = vrcp.pop %v1427
    %v1439 = vrcp.pop %v1428
    %v1440 = vrcp.pop %v1429
    %v1441 = vrcp.pop %v1430
    %v1442 = vrcp.pop %v1431
    %v1443 = vrcp.pop %v1432
    %v1444 = vrcp.pop %v1433
    %v1445 = vrcp.pop %v1434
    %v1446 = vrcp.pop %v1435
    %1447 = vst [vmem:[%s8] sm:$0xff] %v1436
    %1448 = vst [vmem:[%s8 + $0x8] sm:$0xff] %v1437
    %1449 = vst [vmem:[%s8 + $0x10] sm:$0xff] %v1438
    %1450 = vst [vmem:[%s8 + $0x18] sm:$0xff] %v1439
    %1451 = vst [vmem:[%s8 + $0x20] sm:$0xff] %v1440
    %1452 = vst [vmem:[%s8 + $0x28] sm:$0xff] %v1441
    %1453 = vst [vmem:[%s8 + $0x30] sm:$0xff] %v1442
    %1454 = vst [vmem:[%s8 + $0x38] sm:$0xff] %v1443
    %1455 = vst [vmem:[%s8 + $0x40] sm:$0xff] %v1444
    %1456 = vst [vmem:[%s8 + $0x48] sm:$0xff] %v1445
    %1457 = vst [vmem:[%s8 + $0x50] sm:$0xff] %v1446
    // Predicated region
    $region46: #{mlp_forward.1} parent=1 // pred_check
      _
    $region47: #{mlp_forward.1} parent=1 // pred_check_branch
      %1459 = sbr.rel (0) target = $region49
    $region48: #{mlp_forward.1} parent=1 // pred_region
      _
    $region49: #{mlp_forward.1} parent=1 // pred_fallthru
      _
    // Predicated region
    $region50: #{mlp_forward.1} parent=1 // pred_check
      _
    $region51: #{mlp_forward.1} parent=1 // pred_check_branch
      %1461 = sbr.rel (0) target = $region53
    $region52: #{mlp_forward.1} parent=1 // pred_region
      _
    $region53: #{mlp_forward.1} parent=1 // pred_fallthru
      _
    // Predicated region
    $region54: #{mlp_forward.1} parent=1 // pred_check
      _
    $region55: #{mlp_forward.1} parent=1 // pred_check_branch
      %1463 = sbr.rel (0) target = $region57
    $region56: #{mlp_forward.1} parent=1 // pred_region
      _
    $region57: #{mlp_forward.1} parent=1 // pred_fallthru
      _
    // Predicated region
    $region58: #{mlp_forward.1} parent=1 // pred_check
      _
    $region59: #{mlp_forward.1} parent=1 // pred_check_branch
      %1465 = sbr.rel (0) target = $region61
    $region60: #{mlp_forward.1} parent=1 // pred_region
      _
    $region61: #{mlp_forward.1} parent=1 // pred_fallthru
      _
    %1466 = vsyncpa [#allocation3], 1
    %1467 = vsyncpa [#allocation5], 1
    %1468 = vsyncpa [#allocation8], 1

</llo_original>
